<compile_context>
chip_gen: v7x
topology: tpu7x:2x2x1
jax: 0.10.0
libtpu: 0.0.40
codegen_flags: <defaults>
</compile_context>

<pallas_src>
import jax
import jax.numpy as jnp
from jax.experimental import pallas as pl
from jax.experimental.pallas import tpu as pltpu


def _round_up(n: int, m: int) -> int:
    return (n + m - 1) // m * m


def _dgex_kernel(x_ref, w1_ref, b1_ref, mask_ref, w2_ref, b2_ref, o_ref):
    # fc1 + tanh + dropout. x/w1/b1/mask have grid-constant index maps, so they are
    # DMA'd once and stay resident; recomputing this tiny (B x H) block per output
    # tile keeps grid steps independent (safe for "parallel" semantics) and is fully
    # hidden under the w2 tile DMA.
    h = jnp.tanh(
        jnp.dot(x_ref[...], w1_ref[...], preferred_element_type=jnp.float32)
        + b1_ref[...]
    )
    h = (h * mask_ref[...]).astype(jnp.bfloat16)

    # fc2 for this output tile (bf16 x bf16 on the MXU, f32 accumulation).
    o_ref[...] = (
        jnp.dot(h, w2_ref[...], preferred_element_type=jnp.float32) + b2_ref[...]
    )


def dgex_forward(x, w1, b1, w2, b2, *, dropout_rate=0.0, rng_key=None,
                 training=True, tile_n=1024):
    """Forward pass of D-GEX Network: fc2(dropout(tanh(fc1(x))))."""
    B, K = x.shape
    Kw, H = w1.shape
    Hw, Dout = w2.shape
    assert K == Kw and H == Hw

    # Pad to MXU/lane-friendly shapes (zeros -> no effect on the result).
    Bp = _round_up(max(B, 8), 8)          # sublane multiple
    Kp = _round_up(K, 128)                # contraction dim, 943 -> 1024
    Hp = _round_up(H, 128)                # hidden dim
    tile_n = max(128, _round_up(min(tile_n, _round_up(Dout, 128)), 128))
    Np = _round_up(Dout, tile_n)          # 4760 -> 5120 with tile_n=1024

    x_p = jnp.zeros((Bp, Kp), jnp.bfloat16).at[:B, :K].set(x.astype(jnp.bfloat16))
    w1_p = jnp.zeros((Kp, Hp), jnp.bfloat16).at[:K, :H].set(w1.astype(jnp.bfloat16))
    b1_p = jnp.zeros((1, Hp), jnp.float32).at[:, :H].set(b1.astype(jnp.float32))
    w2_p = jnp.zeros((Hp, Np), jnp.bfloat16).at[:H, :Dout].set(w2.astype(jnp.bfloat16))
    b2_p = jnp.zeros((1, Np), jnp.float32).at[:, :Dout].set(b2.astype(jnp.float32))

    # Dropout as a precomputed scaled keep-mask (nn.Dropout train semantics:
    # zero with prob p, survivors scaled by 1/(1-p)). Caller must vary rng_key
    # per training step for unbiased gradients.
    apply_dropout = bool(training) and float(dropout_rate) > 0.0
    if apply_dropout:
        if rng_key is None:
            rng_key = jax.random.PRNGKey(0)
        keep = jax.random.bernoulli(rng_key, 1.0 - float(dropout_rate), (Bp, Hp))
        mask = keep.astype(jnp.float32) * jnp.float32(1.0 / (1.0 - float(dropout_rate)))
    else:
        mask = jnp.ones((Bp, Hp), jnp.float32)

    n_tiles = Np // tile_n
    bytes_accessed = (
        x_p.size * 2 + w1_p.size * 2 + b1_p.size * 4 + mask.size * 4
        + w2_p.size * 2 + b2_p.size * 4 + Bp * Np * 4
    )

    out = pl.pallas_call(
        _dgex_kernel,
        out_shape=jax.ShapeDtypeStruct((Bp, Np), jnp.float32),
        grid_spec=pltpu.PrefetchScalarGridSpec(
            num_scalar_prefetch=0,
            grid=(n_tiles,),
            in_specs=[
                pl.BlockSpec((Bp, Kp), lambda j: (0, 0)),      # x (resident)
                pl.BlockSpec((Kp, Hp), lambda j: (0, 0)),      # w1 (resident)
                pl.BlockSpec((1, Hp), lambda j: (0, 0)),       # b1 (resident)
                pl.BlockSpec((Bp, Hp), lambda j: (0, 0)),      # dropout mask (resident)
                pl.BlockSpec((Hp, tile_n), lambda j: (0, j)),  # w2 tile (streamed)
                pl.BlockSpec((1, tile_n), lambda j: (0, j)),   # b2 tile (streamed)
            ],
            out_specs=pl.BlockSpec((Bp, tile_n), lambda j: (0, j)),
        ),
        compiler_params=pltpu.CompilerParams(
            dimension_semantics=("parallel",),   # shards output tiles across TCs on v7x
        ),
        cost_estimate=pl.CostEstimate(
            flops=2 * Bp * (Kp * Hp + Hp * Np),
            transcendentals=Bp * Hp * n_tiles,
            bytes_accessed=int(bytes_accessed),
        ),
    )(x_p, w1_p, b1_p, mask, w2_p, b2_p)

    return out[:B, :Dout]


def init_params(key, in_features=943, hidden_units=128, out_features=4760):
    """Deterministic init mimicking nn.Linear (uniform +/- 1/sqrt(fan_in))."""
    k1, k2, k3, k4 = jax.random.split(key, 4)
    lim1 = 1.0 / jnp.sqrt(jnp.float32(in_features))
    lim2 = 1.0 / jnp.sqrt(jnp.float32(hidden_units))
    w1 = jax.random.uniform(k1, (in_features, hidden_units), jnp.float32, -lim1, lim1)
    b1 = jax.random.uniform(k2, (1, hidden_units), jnp.float32, -lim1, lim1)
    w2 = jax.random.uniform(k3, (hidden_units, out_features), jnp.float32, -lim2, lim2)
    b2 = jax.random.uniform(k4, (1, out_features), jnp.float32, -lim2, lim2)
    return w1, b1, w2, b2


if __name__ == "__main__":
    key = jax.random.PRNGKey(0)
    kx, kp, kd = jax.random.split(key, 3)

    batch = 8
    hidden_units = 128
    dropout_rate = 0.1  # stands in for float(sys.argv[2]) in the original script

    x = jax.random.normal(kx, (batch, 943), dtype=jnp.float32)
    w1, b1, w2, b2 = init_params(kp, 943, hidden_units, 4760)

    # 1) Deterministic (eval-mode) correctness check against a plain-JAX reference
    #    that uses the same bf16-cast operands the kernel consumes.
    out_eval = dgex_forward(x, w1, b1, w2, b2, dropout_rate=0.0, training=False)
    out_eval = jax.block_until_ready(out_eval)

    xb = x.astype(jnp.bfloat16)
    w1b = w1.astype(jnp.bfloat16)
    w2b = w2.astype(jnp.bfloat16)
    h_ref = jnp.tanh(jnp.dot(xb, w1b, preferred_element_type=jnp.float32) + b1)
    ref = jnp.dot(h_ref.astype(jnp.bfloat16), w2b,
                  preferred_element_type=jnp.float32) + b2
    assert out_eval.shape == (batch, 4760)
    assert jnp.allclose(out_eval, ref, rtol=1e-2, atol=1e-2), "mismatch vs reference"

    # 2) Training-mode forward with dropout (fixed key here for determinism; vary
    #    per step in real training).
    out_train = dgex_forward(x, w1, b1, w2, b2, dropout_rate=dropout_rate,
                             rng_key=kd, training=True)
    out_train = jax.block_until_ready(out_train)
    assert out_train.shape == (batch, 4760)
    assert jnp.all(jnp.isfinite(out_train))

    print("KERNEL_OK")
</pallas_src>

<mosaic_0001>
module attributes {stable_mosaic.version = 11 : i64} {
  func.func @_dgex_kernel(%arg0: i32, %arg1: memref<8x1024xbf16, #tpu.memory_space<vmem>>, %arg2: memref<1024x128xbf16, #tpu.memory_space<vmem>>, %arg3: memref<1x128xf32, #tpu.memory_space<vmem>>, %arg4: memref<8x128xf32, #tpu.memory_space<vmem>>, %arg5: memref<128x1024xbf16, #tpu.memory_space<vmem>>, %arg6: memref<1x1024xf32, #tpu.memory_space<vmem>>, %arg7: memref<8x1024xf32, #tpu.memory_space<vmem>>) attributes {dimension_semantics = [#tpu.dimension_semantics<parallel>], iteration_bounds = array<i64: 5>, scalar_prefetch = 0 : i64, scratch_operands = 0 : i64, tpu.core_type = #tpu.core_type<tc>, window_params = [{pipeline_mode = #tpu.pipeline_mode<synchronous>, transform_indices = @transform_0, window_bounds = array<i64: 8, 1024>}, {pipeline_mode = #tpu.pipeline_mode<synchronous>, transform_indices = @transform_1, window_bounds = array<i64: 1024, 128>}, {pipeline_mode = #tpu.pipeline_mode<synchronous>, transform_indices = @transform_2, window_bounds = array<i64: 1, 128>}, {pipeline_mode = #tpu.pipeline_mode<synchronous>, transform_indices = @transform_3, window_bounds = array<i64: 8, 128>}, {transform_indices = @transform_4, window_bounds = array<i64: 128, 1024>}, {transform_indices = @transform_5, window_bounds = array<i64: 1, 1024>}, {transform_indices = @transform_6, window_bounds = array<i64: 8, 1024>}]} {
    %c0 = arith.constant 0 : index
    %c0_0 = arith.constant 0 : index
    %0 = vector.load %arg1[%c0, %c0_0] : memref<8x1024xbf16, #tpu.memory_space<vmem>>, vector<8x1024xbf16>
    %c0_1 = arith.constant 0 : index
    %c0_2 = arith.constant 0 : index
    %1 = vector.load %arg2[%c0_1, %c0_2] : memref<1024x128xbf16, #tpu.memory_space<vmem>>, vector<1024x128xbf16>
    %cst = arith.constant dense<0.000000e+00> : vector<8x128xf32>
    %2 = tpu.matmul %0, %1, %cst {dimension_numbers = #tpu.dot_dimension_numbers<[1], [0], [0], [1], [0, 0, 1, 1], [], []>} : vector<8x1024xbf16>, vector<1024x128xbf16>, vector<8x128xf32> -> vector<8x128xf32>
    %c0_3 = arith.constant 0 : index
    %c0_4 = arith.constant 0 : index
    %3 = vector.load %arg3[%c0_3, %c0_4] : memref<1x128xf32, #tpu.memory_space<vmem>>, vector<1x128xf32>
    %4 = vector.broadcast %3 : vector<1x128xf32> to vector<8x128xf32>
    %5 = arith.addf %2, %4 : vector<8x128xf32>
    %6 = math.tanh %5 : vector<8x128xf32>
    %c0_5 = arith.constant 0 : index
    %c0_6 = arith.constant 0 : index
    %7 = vector.load %arg4[%c0_5, %c0_6] : memref<8x128xf32, #tpu.memory_space<vmem>>, vector<8x128xf32>
    %8 = arith.mulf %6, %7 : vector<8x128xf32>
    %9 = arith.truncf %8 : vector<8x128xf32> to vector<8x128xbf16>
    %c0_7 = arith.constant 0 : index
    %c0_8 = arith.constant 0 : index
    %10 = vector.load %arg5[%c0_7, %c0_8] : memref<128x1024xbf16, #tpu.memory_space<vmem>>, vector<128x1024xbf16>
    %cst_9 = arith.constant dense<0.000000e+00> : vector<8x1024xf32>
    %11 = tpu.matmul %9, %10, %cst_9 {dimension_numbers = #tpu.dot_dimension_numbers<[1], [0], [0], [1], [0, 0, 1, 1], [], []>} : vector<8x128xbf16>, vector<128x1024xbf16>, vector<8x1024xf32> -> vector<8x1024xf32>
    %c0_10 = arith.constant 0 : index
    %c0_11 = arith.constant 0 : index
    %12 = vector.load %arg6[%c0_10, %c0_11] : memref<1x1024xf32, #tpu.memory_space<vmem>>, vector<1x1024xf32>
    %13 = vector.broadcast %12 : vector<1x1024xf32> to vector<8x1024xf32>
    %14 = arith.addf %11, %13 : vector<8x1024xf32>
    %c0_12 = arith.constant 0 : index
    %c0_13 = arith.constant 0 : index
    %15 = vector.load %arg7[%c0_12, %c0_13] : memref<8x1024xf32, #tpu.memory_space<vmem>>, vector<8x1024xf32>
    tpu.vector_store %arg7[%c0_12, %c0_13], %14 {strides = array<i32>} : memref<8x1024xf32, #tpu.memory_space<vmem>>, vector<8x1024xf32>,
    return
  }
  func.func @transform_0(%arg0: i32) -> (i32, i32) {
    %c0_i32 = arith.constant 0 : i32
    %c0_i32_0 = arith.constant 0 : i32
    %c0_i32_1 = arith.constant 0 : i32
    return %c0_i32, %c0_i32_0 : i32, i32
  }
  func.func @transform_1(%arg0: i32) -> (i32, i32) {
    %c0_i32 = arith.constant 0 : i32
    %c0_i32_0 = arith.constant 0 : i32
    %c0_i32_1 = arith.constant 0 : i32
    return %c0_i32, %c0_i32_0 : i32, i32
  }
  func.func @transform_2(%arg0: i32) -> (i32, i32) {
    %c0_i32 = arith.constant 0 : i32
    %c0_i32_0 = arith.constant 0 : i32
    %c0_i32_1 = arith.constant 0 : i32
    return %c0_i32, %c0_i32_0 : i32, i32
  }
  func.func @transform_3(%arg0: i32) -> (i32, i32) {
    %c0_i32 = arith.constant 0 : i32
    %c0_i32_0 = arith.constant 0 : i32
    %c0_i32_1 = arith.constant 0 : i32
    return %c0_i32, %c0_i32_0 : i32, i32
  }
  func.func @transform_4(%arg0: i32) -> (i32, i32) {
    %c0_i32 = arith.constant 0 : i32
    %c0_i32_0 = arith.constant 0 : i32
    return %c0_i32, %arg0 : i32, i32
  }
  func.func @transform_5(%arg0: i32) -> (i32, i32) {
    %c0_i32 = arith.constant 0 : i32
    %c0_i32_0 = arith.constant 0 : i32
    return %c0_i32, %arg0 : i32, i32
  }
  func.func @transform_6(%arg0: i32) -> (i32, i32) {
    %c0_i32 = arith.constant 0 : i32
    %c0_i32_0 = arith.constant 0 : i32
    return %c0_i32, %arg0 : i32, i32
  }
}

</mosaic_0001>

<llo_original>
// kernel: tpu_custom_call.1
$region0: #{tpu_custom_call.1}
  #allocation0 [shape = 'u32[]', space=smem, size = 0x4, offset = 0x4, fixed_abs, tag = 'smem constant byte address 0x4 - core index']
  #allocation1 [shape = 'u32[144,128]{1,0:T(1,128)}', space=vmem, size = 0x12000, scoped, tag = 'internal scratch']
  %s0 = inlined_call_operand.hbm [shape: bf16[8,1024], index: 0, kind: input, shape index: {}]
  %s1 = inlined_call_operand.hbm [shape: bf16[1024,128], index: 1, kind: input, shape index: {}]
  %s2 = inlined_call_operand.hbm [shape: f32[1,128], index: 2, kind: input, shape index: {}]
  %s3 = inlined_call_operand.hbm [shape: f32[8,128], index: 3, kind: input, shape index: {}]
  %s4 = inlined_call_operand.hbm [shape: bf16[128,5120], index: 4, kind: input, shape index: {}]
  %s5 = inlined_call_operand.hbm [shape: f32[1,5120], index: 5, kind: input, shape index: {}]
  %s6 = inlined_call_operand.hbm [shape: f32[8,5120], index: 6, kind: output, shape index: {}]
  %s7 = sld [smem:[#allocation0]]
  $region81: #{tpu_custom_call.1} parent=0
    _
  %s9 = ssub.s32 1, %s7
  %s10 = scalar_select 0, %s9, %s7
  $region1: #{tpu_custom_call.1} parent=0
    #allocation2 [shape = 'u8[16384]{0}', space=vmem, size = 0x4000, scoped, tag = 'input window, operand 0, single buffered']
    #allocation3 [shape = 's32[2]{0}', space=sflag, size = 0x8, scoped, tag = 'scoped memory for tpu_custom_call.1']
    #allocation4 [shape = 's32[2]{0}', space=sflag, size = 0x8, scoped, tag = 'scoped memory for tpu_custom_call.1']
    #allocation5 [shape = 'u8[262144]{0}', space=vmem, size = 0x40000, scoped, tag = 'input window, operand 1, single buffered']
    #allocation6 [shape = 's32[1]{0}', space=sflag, size = 0x4, scoped, tag = 'scoped memory for tpu_custom_call.1']
    #allocation7 [shape = 'u8[512]{0}', space=vmem, size = 0x400, scoped, tag = 'input window, operand 2, single buffered']
    #allocation8 [shape = 'u8[4096]{0}', space=vmem, size = 0x1000, scoped, tag = 'input window, operand 3, single buffered']
    #allocation9 [shape = 's32[1]{0}', space=sflag, size = 0x4, scoped, tag = 'scoped memory for tpu_custom_call.1']
    #allocation10 [shape = 'u8[524288]{0}', space=vmem, size = 0x80000, scoped, tag = 'input window, operand 4']
    #allocation11 [shape = 'u8[8192]{0}', space=vmem, size = 0x2000, scoped, tag = 'input window, operand 5']
    #allocation12 [shape = 'u8[65536]{0}', space=vmem, size = 0x10000, scoped, tag = 'output window, operand 0']
    %11 = vsyncpa [#allocation3], 0
    %12 = vsyncpa [#allocation6], 0
    %13 = vsyncpa [#allocation9], 0
    %14 = vsyncpa [#allocation4], 0
    %s15 = scalar_lea.sflag [#allocation4], 1
    %16 = vsyncpa %s15, 0
    loop: start=0, step=1, limit=7
    $region2: #{tpu_custom_call.1} parent=1 // loop_pre_header
      _
    $region3: #{tpu_custom_call.1} parent=1 // loop_header
      %s18 = sphi 0, %s22
      %p19 = scmp.ge.s32.totalorder %s18, 7
      %s26 = sphi 0, %s26
      %s28 = sphi 0, %s26
      %s29 = sphi 0, %s28
      %s43 = sphi 0, %s29
      %s47 = sphi 0, %s47
      %s49 = sphi 0, %s47
      %s50 = sphi 0, %s49
      %s64 = sphi 0, %s50
      %s68 = sphi 0, %s68
      %s70 = sphi 0, %s68
      %s71 = sphi 0, %s70
      %s85 = sphi 0, %s71
      %s89 = sphi 0, %s89
      %s91 = sphi 0, %s89
      %s92 = sphi 0, %s91
      %s106 = sphi 0, %s92
      %s112 = sphi 0, %s114
      %s115 = sphi 0, %s112
      %s116 = sphi 0, %s115
      %s132 = sphi 0, %s116
      %s138 = sphi 0, %s140
      %s141 = sphi 0, %s138
      %s142 = sphi 0, %s141
      %s158 = sphi 0, %s142
      %s164 = sphi 0, %s166
      %s167 = sphi 0, %s164
      %s168 = sphi 0, %s167
      %s184 = sphi 0, %s168
    $region4: #{tpu_custom_call.1} parent=1 // loop_header_branch
      %21 = sbr.rel (%p19) target = $region8
    $region5: #{tpu_custom_call.1} parent=1 // loop_body
      %s23 = ssub.s32 %s18, 1
      %s24 = ssub.s32 %s18, 2
      %s25 = sadd.s32 %s18, 1
      %s27 = sadd.s32 %s26, 1
      %p30 = scmp.eq.s32.totalorder %s18, 4
      %p31 = scmp.ne.s32.totalorder %s26, %s28
      %p32 = scmp.eq.s32.totalorder %s18, 0
      %p33 = por %p31, %p32
      %p34 = scmp.ne.s32.totalorder %s26, %s28
      %p35 = scmp.eq.s32.totalorder %s23, 4
      %p36 = por %p34, %p35
      %p37 = scmp.ne.s32.totalorder %s28, %s29
      %p38 = scmp.eq.s32.totalorder %s23, 0
      %p39 = por %p37, %p38
      %p40 = scmp.ne.s32.totalorder %s28, %s29
      %p41 = scmp.eq.s32.totalorder %s24, 4
      %p42 = por %p40, %p41
      %p44 = scmp.ne.s32.totalorder %s29, %s43
      %p45 = scmp.eq.s32.totalorder %s24, 0
      %p46 = por %p44, %p45
      %s48 = sadd.s32 %s47, 1
      %p51 = scmp.eq.s32.totalorder %s18, 4
      %p52 = scmp.ne.s32.totalorder %s47, %s49
      %p53 = scmp.eq.s32.totalorder %s18, 0
      %p54 = por %p52, %p53
      %p55 = scmp.ne.s32.totalorder %s47, %s49
      %p56 = scmp.eq.s32.totalorder %s23, 4
      %p57 = por %p55, %p56
      %p58 = scmp.ne.s32.totalorder %s49, %s50
      %p59 = scmp.eq.s32.totalorder %s23, 0
      %p60 = por %p58, %p59
      %p61 = scmp.ne.s32.totalorder %s49, %s50
      %p62 = scmp.eq.s32.totalorder %s24, 4
      %p63 = por %p61, %p62
      %p65 = scmp.ne.s32.totalorder %s50, %s64
      %p66 = scmp.eq.s32.totalorder %s24, 0
      %p67 = por %p65, %p66
      %s69 = sadd.s32 %s68, 1
      %p72 = scmp.eq.s32.totalorder %s18, 4
      %p73 = scmp.ne.s32.totalorder %s68, %s70
      %p74 = scmp.eq.s32.totalorder %s18, 0
      %p75 = por %p73, %p74
      %p76 = scmp.ne.s32.totalorder %s68, %s70
      %p77 = scmp.eq.s32.totalorder %s23, 4
      %p78 = por %p76, %p77
      %p79 = scmp.ne.s32.totalorder %s70, %s71
      %p80 = scmp.eq.s32.totalorder %s23, 0
      %p81 = por %p79, %p80
      %p82 = scmp.ne.s32.totalorder %s70, %s71
      %p83 = scmp.eq.s32.totalorder %s24, 4
      %p84 = por %p82, %p83
      %p86 = scmp.ne.s32.totalorder %s71, %s85
      %p87 = scmp.eq.s32.totalorder %s24, 0
      %p88 = por %p86, %p87
      %s90 = sadd.s32 %s89, 1
      %p93 = scmp.eq.s32.totalorder %s18, 4
      %p94 = scmp.ne.s32.totalorder %s89, %s91
      %p95 = scmp.eq.s32.totalorder %s18, 0
      %p96 = por %p94, %p95
      %p97 = scmp.ne.s32.totalorder %s89, %s91
      %p98 = scmp.eq.s32.totalorder %s23, 4
      %p99 = por %p97, %p98
      %p100 = scmp.ne.s32.totalorder %s91, %s92
      %p101 = scmp.eq.s32.totalorder %s23, 0
      %p102 = por %p100, %p101
      %p103 = scmp.ne.s32.totalorder %s91, %s92
      %p104 = scmp.eq.s32.totalorder %s24, 4
      %p105 = por %p103, %p104
      %p107 = scmp.ne.s32.totalorder %s92, %s106
      %p108 = scmp.eq.s32.totalorder %s24, 0
      %p109 = por %p107, %p108
      %s110 = ssub.s32 %s18, %s25
      %p111 = scmp.eq.s32.totalorder %s110, 0
      %s113 = sadd.s32 %s112, 1
      %s114 = scalar_select %p111, %s112, %s113
      %p117 = pneg %p111
      %p118 = scmp.eq.s32.totalorder %s18, 4
      %p119 = por %p117, %p118
      %p120 = scmp.ne.s32.totalorder %s112, %s115
      %p121 = scmp.eq.s32.totalorder %s18, 0
      %p122 = por %p120, %p121
      %p123 = scmp.ne.s32.totalorder %s112, %s115
      %p124 = scmp.eq.s32.totalorder %s23, 4
      %p125 = por %p123, %p124
      %p126 = scmp.ne.s32.totalorder %s115, %s116
      %p127 = scmp.eq.s32.totalorder %s23, 0
      %p128 = por %p126, %p127
      %p129 = scmp.ne.s32.totalorder %s115, %s116
      %p130 = scmp.eq.s32.totalorder %s24, 4
      %p131 = por %p129, %p130
      %p133 = scmp.ne.s32.totalorder %s116, %s132
      %p134 = scmp.eq.s32.totalorder %s24, 0
      %p135 = por %p133, %p134
      %s136 = ssub.s32 %s18, %s25
      %p137 = scmp.eq.s32.totalorder %s136, 0
      %s139 = sadd.s32 %s138, 1
      %s140 = scalar_select %p137, %s138, %s139
      %p143 = pneg %p137
      %p144 = scmp.eq.s32.totalorder %s18, 4
      %p145 = por %p143, %p144
      %p146 = scmp.ne.s32.totalorder %s138, %s141
      %p147 = scmp.eq.s32.totalorder %s18, 0
      %p148 = por %p146, %p147
      %p149 = scmp.ne.s32.totalorder %s138, %s141
      %p150 = scmp.eq.s32.totalorder %s23, 4
      %p151 = por %p149, %p150
      %p152 = scmp.ne.s32.totalorder %s141, %s142
      %p153 = scmp.eq.s32.totalorder %s23, 0
      %p154 = por %p152, %p153
      %p155 = scmp.ne.s32.totalorder %s141, %s142
      %p156 = scmp.eq.s32.totalorder %s24, 4
      %p157 = por %p155, %p156
      %p159 = scmp.ne.s32.totalorder %s142, %s158
      %p160 = scmp.eq.s32.totalorder %s24, 0
      %p161 = por %p159, %p160
      %s162 = ssub.s32 %s18, %s25
      %p163 = scmp.eq.s32.totalorder %s162, 0
      %s165 = sadd.s32 %s164, 1
      %s166 = scalar_select %p163, %s164, %s165
      %p169 = pneg %p163
      %p170 = scmp.eq.s32.totalorder %s18, 4
      %p171 = por %p169, %p170
      %p172 = scmp.ne.s32.totalorder %s164, %s167
      %p173 = scmp.eq.s32.totalorder %s18, 0
      %p174 = por %p172, %p173
      %p175 = scmp.ne.s32.totalorder %s164, %s167
      %p176 = scmp.eq.s32.totalorder %s23, 4
      %p177 = por %p175, %p176
      %p178 = scmp.ne.s32.totalorder %s167, %s168
      %p179 = scmp.eq.s32.totalorder %s23, 0
      %p180 = por %p178, %p179
      %p181 = scmp.ne.s32.totalorder %s167, %s168
      %p182 = scmp.eq.s32.totalorder %s24, 4
      %p183 = por %p181, %p182
      %p185 = scmp.ne.s32.totalorder %s168, %s184
      %p186 = scmp.eq.s32.totalorder %s24, 0
      %p187 = por %p185, %p186
      %p188 = scmp.le.s32.totalorder 1, %s18
      %p189 = scmp.lt.s32.totalorder %s18, 6
      %p190 = pnand %p188, %p189
      %p191 = pneg %p190
      // Predicated region
      $region9: #{tpu_custom_call.1} parent=5 // pred_check
        _
      $region10: #{tpu_custom_call.1} parent=5 // pred_check_branch
        %193 = sbr.rel (%p190) target = $region12
      $region11: #{tpu_custom_call.1} parent=5 // pred_region
        %s194 = ssub.s32 %s18, 1
        // Predicated region
        $region13: #{tpu_custom_call.1} parent=11 // pred_check
          %p195 = pneg %p39
        $region14: #{tpu_custom_call.1} parent=11 // pred_check_branch
          %197 = sbr.rel (%p195) target = $region16
        $region15: #{tpu_custom_call.1} parent=11 // pred_region
          %s199 = ssub.s32 512, 512
          %200 = vsyncadd [#allocation3], %s199
          %s202 = sshll.u32 [#allocation2], 4
          %s203 = int_to_ptr.vmem [resolvable:$true] %s202
          %205 = dma.hbm_to_vmem [thread:$0]  %s0, 512, %s203, [#allocation3]
        $region16: #{tpu_custom_call.1} parent=11 // pred_fallthru
          _
        // Predicated region
        $region17: #{tpu_custom_call.1} parent=11 // pred_check
          %p206 = pneg %p60
        $region18: #{tpu_custom_call.1} parent=11 // pred_check_branch
          %208 = sbr.rel (%p206) target = $region20
        $region19: #{tpu_custom_call.1} parent=11 // pred_region
          %s210 = ssub.s32 8192, 8192
          %211 = vsyncadd [#allocation6], %s210
          %s212 = sshll.u32 [#allocation5], 4
          %s213 = int_to_ptr.vmem [resolvable:$true] %s212
          %218 = dma.hbm_to_vmem [thread:$0]  %s1, 8192, %s213, [#allocation6], 64, 64, 4
        $region20: #{tpu_custom_call.1} parent=11 // pred_fallthru
          _
        // Predicated region
        $region21: #{tpu_custom_call.1} parent=11 // pred_check
          %p219 = pneg %p81
        $region22: #{tpu_custom_call.1} parent=11 // pred_check_branch
          %221 = sbr.rel (%p219) target = $region24
        $region23: #{tpu_custom_call.1} parent=11 // pred_region
          %s223 = ssub.s32 16, 16
          %224 = vsyncadd [#allocation6], %s223
          %s226 = sshll.u32 [#allocation7], 4
          %s227 = int_to_ptr.vmem [resolvable:$true] %s226
          %229 = dma.hbm_to_vmem [thread:$0]  %s2, 16, %s227, [#allocation6]
        $region24: #{tpu_custom_call.1} parent=11 // pred_fallthru
          _
        // Predicated region
        $region25: #{tpu_custom_call.1} parent=11 // pred_check
          %p230 = pneg %p102
        $region26: #{tpu_custom_call.1} parent=11 // pred_check_branch
          %232 = sbr.rel (%p230) target = $region28
        $region27: #{tpu_custom_call.1} parent=11 // pred_region
          %s234 = ssub.s32 128, 128
          %235 = vsyncadd [#allocation9], %s234
          %s237 = sshll.u32 [#allocation8], 4
          %s238 = int_to_ptr.vmem [resolvable:$true] %s237
          %240 = dma.hbm_to_vmem [thread:$0]  %s3, 128, %s238, [#allocation9]
        $region28: #{tpu_custom_call.1} parent=11 // pred_fallthru
          _
      $region12: #{tpu_custom_call.1} parent=5 // pred_fallthru
        _
      %p241 = scmp.lt.s32.totalorder %s18, 5
      // Predicated region
      $region29: #{tpu_custom_call.1} parent=5 // pred_check
        %p242 = pneg %p241
      $region30: #{tpu_custom_call.1} parent=5 // pred_check_branch
        %244 = sbr.rel (%p242) target = $region32
      $region31: #{tpu_custom_call.1} parent=5 // pred_region
        // Predicated region
        $region33: #{tpu_custom_call.1} parent=31 // pred_check
          %p245 = pneg %p122
        $region34: #{tpu_custom_call.1} parent=31 // pred_check_branch
          %247 = sbr.rel (%p245) target = $region36
        $region35: #{tpu_custom_call.1} parent=31 // pred_region
          %s248 = sand.u32 %s18, 1
          %s249 = scalar_lea.sflag [#allocation3], %s248
          %s250 = sand.u32 %s112, 1
          %s251 = smul.addr %s250, 512
          %s252 = scalar_lea.vmem [#allocation10], %s251
          %s253 = smul.u32 8, %s18
          %s255 = ssub.s32 8192, 8192
          %256 = vsyncadd %s249, %s255
          %s257 = smul.addr %s253, 64
          %s258 = scalar_lea.hbm %s4, %s257
          %s259 = sshll.u32 %s252, 4
          %s260 = int_to_ptr.vmem [resolvable:$true] %s259
          %265 = dma.hbm_to_vmem [thread:$0]  %s258, 8192, %s260, %s249, 2560, 512, 32
        $region36: #{tpu_custom_call.1} parent=31 // pred_fallthru
          _
        // Predicated region
        $region37: #{tpu_custom_call.1} parent=31 // pred_check
          %p266 = pneg %p148
        $region38: #{tpu_custom_call.1} parent=31 // pred_check_branch
          %268 = sbr.rel (%p266) target = $region40
        $region39: #{tpu_custom_call.1} parent=31 // pred_region
          %s269 = sand.u32 %s18, 1
          %s270 = scalar_lea.sflag [#allocation3], %s269
          %s271 = sand.u32 %s138, 1
          %s272 = smul.addr %s271, 8
          %s273 = scalar_lea.vmem [#allocation11], %s272
          %s274 = smul.u32 8, %s18
          %s276 = ssub.s32 128, 128
          %277 = vsyncadd %s270, %s276
          %s278 = smul.addr %s274, 16
          %s279 = scalar_lea.hbm %s5, %s278
          %s281 = sshll.u32 %s273, 4
          %s282 = int_to_ptr.vmem [resolvable:$true] %s281
          %284 = dma.hbm_to_vmem [thread:$0]  %s279, 128, %s282, %s270
        $region40: #{tpu_custom_call.1} parent=31 // pred_fallthru
          _
      $region32: #{tpu_custom_call.1} parent=5 // pred_fallthru
        _
      %p285 = scmp.le.s32.totalorder 1, %s18
      %p286 = scmp.lt.s32.totalorder %s18, 6
      %p287 = pnand %p285, %p286
      %p288 = pneg %p287
      // Predicated region
      $region41: #{tpu_custom_call.1} parent=5 // pred_check
        _
      $region42: #{tpu_custom_call.1} parent=5 // pred_check_branch
        %290 = sbr.rel (%p287) target = $region44
      $region43: #{tpu_custom_call.1} parent=5 // pred_region
        %s291 = ssub.s32 %s18, 1
        // Predicated region
        $region45: #{tpu_custom_call.1} parent=43 // pred_check
          %p292 = pneg %p39
        $region46: #{tpu_custom_call.1} parent=43 // pred_check_branch
          %294 = sbr.rel (%p292) target = $region48
        $region47: #{tpu_custom_call.1} parent=43 // pred_region
          %295 = dma.done [#allocation3], 512
        $region48: #{tpu_custom_call.1} parent=43 // pred_fallthru
          _
        // Predicated region
        $region49: #{tpu_custom_call.1} parent=43 // pred_check
          %p296 = pneg %p60
        $region50: #{tpu_custom_call.1} parent=43 // pred_check_branch
          %298 = sbr.rel (%p296) target = $region52
        $region51: #{tpu_custom_call.1} parent=43 // pred_region
          %299 = dma.done [#allocation6], 8192
        $region52: #{tpu_custom_call.1} parent=43 // pred_fallthru
          _
        // Predicated region
        $region53: #{tpu_custom_call.1} parent=43 // pred_check
          %p300 = pneg %p81
        $region54: #{tpu_custom_call.1} parent=43 // pred_check_branch
          %302 = sbr.rel (%p300) target = $region56
        $region55: #{tpu_custom_call.1} parent=43 // pred_region
          %303 = dma.done [#allocation6], 16
        $region56: #{tpu_custom_call.1} parent=43 // pred_fallthru
          _
        // Predicated region
        $region57: #{tpu_custom_call.1} parent=43 // pred_check
          %p304 = pneg %p102
        $region58: #{tpu_custom_call.1} parent=43 // pred_check_branch
          %306 = sbr.rel (%p304) target = $region60
        $region59: #{tpu_custom_call.1} parent=43 // pred_region
          %307 = dma.done [#allocation9], 128
        $region60: #{tpu_custom_call.1} parent=43 // pred_fallthru
          _
        %s308 = sand.u32 %s23, 1
        %s309 = scalar_lea.sflag [#allocation3], %s308
        %s310 = sand.u32 %s115, 1
        %s311 = smul.addr %s310, 512
        %s312 = scalar_lea.vmem [#allocation10], %s311
        // Predicated region
        $region61: #{tpu_custom_call.1} parent=43 // pred_check
          %p313 = pneg %p128
        $region62: #{tpu_custom_call.1} parent=43 // pred_check_branch
          %315 = sbr.rel (%p313) target = $region64
        $region63: #{tpu_custom_call.1} parent=43 // pred_region
          %316 = dma.done %s309, 8192
        $region64: #{tpu_custom_call.1} parent=43 // pred_fallthru
          _
        %s317 = sand.u32 %s23, 1
        %s318 = scalar_lea.sflag [#allocation3], %s317
        %s319 = sand.u32 %s141, 1
        %s320 = smul.addr %s319, 8
        %s321 = scalar_lea.vmem [#allocation11], %s320
        // Predicated region
        $region65: #{tpu_custom_call.1} parent=43 // pred_check
          %p322 = pneg %p154
        $region66: #{tpu_custom_call.1} parent=43 // pred_check_branch
          %324 = sbr.rel (%p322) target = $region68
        $region67: #{tpu_custom_call.1} parent=43 // pred_region
          %325 = dma.done %s318, 128
        $region68: #{tpu_custom_call.1} parent=43 // pred_fallthru
          _
        %p326 = pneg %p39
        %p327 = pneg %p36
        %p328 = pneg %p60
        %p329 = pneg %p57
        %p330 = pneg %p81
        %p331 = pneg %p78
        %p332 = pneg %p102
        %p333 = pneg %p99
        %s334 = sand.u32 %s23, 1
        %s335 = scalar_lea.sflag [#allocation3], %s334
        %s336 = sand.u32 %s115, 1
        %s337 = smul.addr %s336, 512
        %s338 = scalar_lea.vmem [#allocation10], %s337
        %p339 = pneg %p128
        %p340 = pneg %p125
        %s341 = sand.u32 %s23, 1
        %s342 = scalar_lea.sflag [#allocation3], %s341
        %s343 = sand.u32 %s141, 1
        %s344 = smul.addr %s343, 8
        %s345 = scalar_lea.vmem [#allocation11], %s344
        %p346 = pneg %p154
        %p347 = pneg %p151
        %p348 = pneg %p180
        %p349 = pneg %p177
        %s350 = sand.u32 %s167, 1
        %s351 = scalar_lea.sflag [#allocation4], %s350
        %s352 = sand.u32 %s167, 1
        %s353 = smul.addr %s352, 64
        %s354 = scalar_lea.vmem [#allocation12], %s353
        %s355 = smul.u32 8, %s23
        %s356 = smul.u32 8, %s23
        %s357 = smul.u32 8, %s23
        %v359 = vld [vmem:[#allocation2] sm:$0xff]
        %v360 = vld [vmem:[#allocation2 + $0x8] sm:$0xff]
        %v361 = vld [vmem:[#allocation2 + $0x10] sm:$0xff]
        %v362 = vld [vmem:[#allocation2 + $0x18] sm:$0xff]
        %v363 = vld [vmem:[#allocation5] sm:$0xf]
        %v364 = vld [vmem:[#allocation5 + $0x4] sm:$0xf]
        %v365 = vld [vmem:[#allocation5 + $0x8] sm:$0xf]
        %v366 = vld [vmem:[#allocation5 + $0xc] sm:$0xf]
        %v367 = vld [vmem:[#allocation5 + $0x10] sm:$0xf]
        %v368 = vld [vmem:[#allocation5 + $0x14] sm:$0xf]
        %v369 = vld [vmem:[#allocation5 + $0x18] sm:$0xf]
        %v370 = vld [vmem:[#allocation5 + $0x1c] sm:$0xf]
        %v371 = vld [vmem:[#allocation5 + $0x20] sm:$0xf]
        %v372 = vld [vmem:[#allocation5 + $0x24] sm:$0xf]
        %v373 = vld [vmem:[#allocation5 + $0x28] sm:$0xf]
        %v374 = vld [vmem:[#allocation5 + $0x2c] sm:$0xf]
        %v375 = vld [vmem:[#allocation5 + $0x30] sm:$0xf]
        %v376 = vld [vmem:[#allocation5 + $0x34] sm:$0xf]
        %v377 = vld [vmem:[#allocation5 + $0x38] sm:$0xf]
        %v378 = vld [vmem:[#allocation5 + $0x3c] sm:$0xf]
        %v379 = vld [vmem:[#allocation5 + $0x40] sm:$0xf]
        %v380 = vld [vmem:[#allocation5 + $0x44] sm:$0xf]
        %v381 = vld [vmem:[#allocation5 + $0x48] sm:$0xf]
        %v382 = vld [vmem:[#allocation5 + $0x4c] sm:$0xf]
        %v383 = vld [vmem:[#allocation5 + $0x50] sm:$0xf]
        %v384 = vld [vmem:[#allocation5 + $0x54] sm:$0xf]
        %v385 = vld [vmem:[#allocation5 + $0x58] sm:$0xf]
        %v386 = vld [vmem:[#allocation5 + $0x5c] sm:$0xf]
        %v387 = vld [vmem:[#allocation5 + $0x60] sm:$0xf]
        %v388 = vld [vmem:[#allocation5 + $0x64] sm:$0xf]
        %v389 = vld [vmem:[#allocation5 + $0x68] sm:$0xf]
        %v390 = vld [vmem:[#allocation5 + $0x6c] sm:$0xf]
        %v391 = vld [vmem:[#allocation5 + $0x70] sm:$0xf]
        %v392 = vld [vmem:[#allocation5 + $0x74] sm:$0xf]
        %v393 = vld [vmem:[#allocation5 + $0x78] sm:$0xf]
        %v394 = vld [vmem:[#allocation5 + $0x7c] sm:$0xf]
        %v395 = vld [vmem:[#allocation5 + $0x80] sm:$0xf]
        %v396 = vld [vmem:[#allocation5 + $0x84] sm:$0xf]
        %v397 = vld [vmem:[#allocation5 + $0x88] sm:$0xf]
        %v398 = vld [vmem:[#allocation5 + $0x8c] sm:$0xf]
        %v399 = vld [vmem:[#allocation5 + $0x90] sm:$0xf]
        %v400 = vld [vmem:[#allocation5 + $0x94] sm:$0xf]
        %v401 = vld [vmem:[#allocation5 + $0x98] sm:$0xf]
        %v402 = vld [vmem:[#allocation5 + $0x9c] sm:$0xf]
        %v403 = vld [vmem:[#allocation5 + $0xa0] sm:$0xf]
        %v404 = vld [vmem:[#allocation5 + $0xa4] sm:$0xf]
        %v405 = vld [vmem:[#allocation5 + $0xa8] sm:$0xf]
        %v406 = vld [vmem:[#allocation5 + $0xac] sm:$0xf]
        %v407 = vld [vmem:[#allocation5 + $0xb0] sm:$0xf]
        %v408 = vld [vmem:[#allocation5 + $0xb4] sm:$0xf]
        %v409 = vld [vmem:[#allocation5 + $0xb8] sm:$0xf]
        %v410 = vld [vmem:[#allocation5 + $0xbc] sm:$0xf]
        %v411 = vld [vmem:[#allocation5 + $0xc0] sm:$0xf]
        %v412 = vld [vmem:[#allocation5 + $0xc4] sm:$0xf]
        %v413 = vld [vmem:[#allocation5 + $0xc8] sm:$0xf]
        %v414 = vld [vmem:[#allocation5 + $0xcc] sm:$0xf]
        %v415 = vld [vmem:[#allocation5 + $0xd0] sm:$0xf]
        %v416 = vld [vmem:[#allocation5 + $0xd4] sm:$0xf]
        %v417 = vld [vmem:[#allocation5 + $0xd8] sm:$0xf]
        %v418 = vld [vmem:[#allocation5 + $0xdc] sm:$0xf]
        %v419 = vld [vmem:[#allocation5 + $0xe0] sm:$0xf]
        %v420 = vld [vmem:[#allocation5 + $0xe4] sm:$0xf]
        %v421 = vld [vmem:[#allocation5 + $0xe8] sm:$0xf]
        %v422 = vld [vmem:[#allocation5 + $0xec] sm:$0xf]
        %v423 = vld [vmem:[#allocation5 + $0xf0] sm:$0xf]
        %v424 = vld [vmem:[#allocation5 + $0xf4] sm:$0xf]
        %v425 = vld [vmem:[#allocation5 + $0xf8] sm:$0xf]
        %v426 = vld [vmem:[#allocation5 + $0xfc] sm:$0xf]
        %v427 = vld [vmem:[#allocation5 + $0x100] sm:$0xf]
        %v428 = vld [vmem:[#allocation5 + $0x104] sm:$0xf]
        %v429 = vld [vmem:[#allocation5 + $0x108] sm:$0xf]
        %v430 = vld [vmem:[#allocation5 + $0x10c] sm:$0xf]
        %v431 = vld [vmem:[#allocation5 + $0x110] sm:$0xf]
        %v432 = vld [vmem:[#allocation5 + $0x114] sm:$0xf]
        %v433 = vld [vmem:[#allocation5 + $0x118] sm:$0xf]
        %v434 = vld [vmem:[#allocation5 + $0x11c] sm:$0xf]
        %v435 = vld [vmem:[#allocation5 + $0x120] sm:$0xf]
        %v436 = vld [vmem:[#allocation5 + $0x124] sm:$0xf]
        %v437 = vld [vmem:[#allocation5 + $0x128] sm:$0xf]
        %v438 = vld [vmem:[#allocation5 + $0x12c] sm:$0xf]
        %v439 = vld [vmem:[#allocation5 + $0x130] sm:$0xf]
        %v440 = vld [vmem:[#allocation5 + $0x134] sm:$0xf]
        %v441 = vld [vmem:[#allocation5 + $0x138] sm:$0xf]
        %v442 = vld [vmem:[#allocation5 + $0x13c] sm:$0xf]
        %v443 = vld [vmem:[#allocation5 + $0x140] sm:$0xf]
        %v444 = vld [vmem:[#allocation5 + $0x144] sm:$0xf]
        %v445 = vld [vmem:[#allocation5 + $0x148] sm:$0xf]
        %v446 = vld [vmem:[#allocation5 + $0x14c] sm:$0xf]
        %v447 = vld [vmem:[#allocation5 + $0x150] sm:$0xf]
        %v448 = vld [vmem:[#allocation5 + $0x154] sm:$0xf]
        %v449 = vld [vmem:[#allocation5 + $0x158] sm:$0xf]
        %v450 = vld [vmem:[#allocation5 + $0x15c] sm:$0xf]
        %v451 = vld [vmem:[#allocation5 + $0x160] sm:$0xf]
        %v452 = vld [vmem:[#allocation5 + $0x164] sm:$0xf]
        %v453 = vld [vmem:[#allocation5 + $0x168] sm:$0xf]
        %v454 = vld [vmem:[#allocation5 + $0x16c] sm:$0xf]
        %v455 = vld [vmem:[#allocation5 + $0x170] sm:$0xf]
        %v456 = vld [vmem:[#allocation5 + $0x174] sm:$0xf]
        %v457 = vld [vmem:[#allocation5 + $0x178] sm:$0xf]
        %v458 = vld [vmem:[#allocation5 + $0x17c] sm:$0xf]
        %v459 = vld [vmem:[#allocation5 + $0x180] sm:$0xf]
        %v460 = vld [vmem:[#allocation5 + $0x184] sm:$0xf]
        %v461 = vld [vmem:[#allocation5 + $0x188] sm:$0xf]
        %v462 = vld [vmem:[#allocation5 + $0x18c] sm:$0xf]
        %v463 = vld [vmem:[#allocation5 + $0x190] sm:$0xf]
        %v464 = vld [vmem:[#allocation5 + $0x194] sm:$0xf]
        %v465 = vld [vmem:[#allocation5 + $0x198] sm:$0xf]
        %v466 = vld [vmem:[#allocation5 + $0x19c] sm:$0xf]
        %v467 = vld [vmem:[#allocation5 + $0x1a0] sm:$0xf]
        %v468 = vld [vmem:[#allocation5 + $0x1a4] sm:$0xf]
        %v469 = vld [vmem:[#allocation5 + $0x1a8] sm:$0xf]
        %v470 = vld [vmem:[#allocation5 + $0x1ac] sm:$0xf]
        %v471 = vld [vmem:[#allocation5 + $0x1b0] sm:$0xf]
        %v472 = vld [vmem:[#allocation5 + $0x1b4] sm:$0xf]
        %v473 = vld [vmem:[#allocation5 + $0x1b8] sm:$0xf]
        %v474 = vld [vmem:[#allocation5 + $0x1bc] sm:$0xf]
        %v475 = vld [vmem:[#allocation5 + $0x1c0] sm:$0xf]
        %v476 = vld [vmem:[#allocation5 + $0x1c4] sm:$0xf]
        %v477 = vld [vmem:[#allocation5 + $0x1c8] sm:$0xf]
        %v478 = vld [vmem:[#allocation5 + $0x1cc] sm:$0xf]
        %v479 = vld [vmem:[#allocation5 + $0x1d0] sm:$0xf]
        %v480 = vld [vmem:[#allocation5 + $0x1d4] sm:$0xf]
        %v481 = vld [vmem:[#allocation5 + $0x1d8] sm:$0xf]
        %v482 = vld [vmem:[#allocation5 + $0x1dc] sm:$0xf]
        %v483 = vld [vmem:[#allocation5 + $0x1e0] sm:$0xf]
        %v484 = vld [vmem:[#allocation5 + $0x1e4] sm:$0xf]
        %v485 = vld [vmem:[#allocation5 + $0x1e8] sm:$0xf]
        %v486 = vld [vmem:[#allocation5 + $0x1ec] sm:$0xf]
        %v487 = vld [vmem:[#allocation5 + $0x1f0] sm:$0xf]
        %v488 = vld [vmem:[#allocation5 + $0x1f4] sm:$0xf]
        %v489 = vld [vmem:[#allocation5 + $0x1f8] sm:$0xf]
        %v490 = vld [vmem:[#allocation5 + $0x1fc] sm:$0xf]
        %v491 = vld [vmem:[#allocation7] sm:$0x1]
        %v493 = vlaneseq
        %v494 = vshrl.u32 %v493, 7
        %v495 = vsub.s32 0, %v494
        %v496 = vrot.slane %v491, %v495
        %v502 = vunpack.c.l.b16 %v359
        %v503 = vunpack.c.h.b16 %v359
        %v504 = vunpack.c.l.b16 %v360
        %v505 = vunpack.c.h.b16 %v360
        %v506 = vunpack.c.l.b16 %v361
        %v507 = vunpack.c.h.b16 %v361
        %v508 = vunpack.c.l.b16 %v362
        %v509 = vunpack.c.h.b16 %v362
        %v510 = vpack.c.b16 %v502, %v502
        %v511 = vpack.c.b16 %v503, %v503
        %v512 = vpack.c.b16 %v504, %v504
        %v513 = vpack.c.b16 %v505, %v505
        %v514 = vpack.c.b16 %v506, %v506
        %v515 = vpack.c.b16 %v507, %v507
        %v516 = vpack.c.b16 %v508, %v508
        %v517 = vpack.c.b16 %v509, %v509
        %v654 = vunpack.c.l.b16 %v363
        %v655 = vunpack.c.l.b16 %v364
        %v656 = vunpack.c.l.b16 %v365
        %v657 = vunpack.c.l.b16 %v366
        %v658 = vunpack.c.l.b16 %v367
        %v659 = vunpack.c.l.b16 %v368
        %v660 = vunpack.c.l.b16 %v369
        %v661 = vunpack.c.l.b16 %v370
        %v662 = vunpack.c.l.b16 %v371
        %v663 = vunpack.c.l.b16 %v372
        %v664 = vunpack.c.l.b16 %v373
        %v665 = vunpack.c.l.b16 %v374
        %v666 = vunpack.c.l.b16 %v375
        %v667 = vunpack.c.l.b16 %v376
        %v668 = vunpack.c.l.b16 %v377
        %v669 = vunpack.c.l.b16 %v378
        %v670 = vunpack.c.l.b16 %v379
        %v671 = vunpack.c.l.b16 %v380
        %v672 = vunpack.c.l.b16 %v381
        %v673 = vunpack.c.l.b16 %v382
        %v674 = vunpack.c.l.b16 %v383
        %v675 = vunpack.c.l.b16 %v384
        %v676 = vunpack.c.l.b16 %v385
        %v677 = vunpack.c.l.b16 %v386
        %v678 = vunpack.c.l.b16 %v387
        %v679 = vunpack.c.l.b16 %v388
        %v680 = vunpack.c.l.b16 %v389
        %v681 = vunpack.c.l.b16 %v390
        %v682 = vunpack.c.l.b16 %v391
        %v683 = vunpack.c.l.b16 %v392
        %v684 = vunpack.c.l.b16 %v393
        %v685 = vunpack.c.l.b16 %v394
        %v686 = vunpack.c.l.b16 %v395
        %v687 = vunpack.c.l.b16 %v396
        %v688 = vunpack.c.l.b16 %v397
        %v689 = vunpack.c.l.b16 %v398
        %v690 = vunpack.c.l.b16 %v399
        %v691 = vunpack.c.l.b16 %v400
        %v692 = vunpack.c.l.b16 %v401
        %v693 = vunpack.c.l.b16 %v402
        %v694 = vunpack.c.l.b16 %v403
        %v695 = vunpack.c.l.b16 %v404
        %v696 = vunpack.c.l.b16 %v405
        %v697 = vunpack.c.l.b16 %v406
        %v698 = vunpack.c.l.b16 %v407
        %v699 = vunpack.c.l.b16 %v408
        %v700 = vunpack.c.l.b16 %v409
        %v701 = vunpack.c.l.b16 %v410
        %v702 = vunpack.c.l.b16 %v411
        %v703 = vunpack.c.l.b16 %v412
        %v704 = vunpack.c.l.b16 %v413
        %v705 = vunpack.c.l.b16 %v414
        %v706 = vunpack.c.l.b16 %v415
        %v707 = vunpack.c.l.b16 %v416
        %v708 = vunpack.c.l.b16 %v417
        %v709 = vunpack.c.l.b16 %v418
        %v710 = vunpack.c.l.b16 %v419
        %v711 = vunpack.c.l.b16 %v420
        %v712 = vunpack.c.l.b16 %v421
        %v713 = vunpack.c.l.b16 %v422
        %v714 = vunpack.c.l.b16 %v423
        %v715 = vunpack.c.l.b16 %v424
        %v716 = vunpack.c.l.b16 %v425
        %v717 = vunpack.c.l.b16 %v426
        %v718 = vunpack.c.l.b16 %v427
        %v719 = vunpack.c.l.b16 %v428
        %v720 = vunpack.c.l.b16 %v429
        %v721 = vunpack.c.l.b16 %v430
        %v722 = vunpack.c.l.b16 %v431
        %v723 = vunpack.c.l.b16 %v432
        %v724 = vunpack.c.l.b16 %v433
        %v725 = vunpack.c.l.b16 %v434
        %v726 = vunpack.c.l.b16 %v435
        %v727 = vunpack.c.l.b16 %v436
        %v728 = vunpack.c.l.b16 %v437
        %v729 = vunpack.c.l.b16 %v438
        %v730 = vunpack.c.l.b16 %v439
        %v731 = vunpack.c.l.b16 %v440
        %v732 = vunpack.c.l.b16 %v441
        %v733 = vunpack.c.l.b16 %v442
        %v734 = vunpack.c.l.b16 %v443
        %v735 = vunpack.c.l.b16 %v444
        %v736 = vunpack.c.l.b16 %v445
        %v737 = vunpack.c.l.b16 %v446
        %v738 = vunpack.c.l.b16 %v447
        %v739 = vunpack.c.l.b16 %v448
        %v740 = vunpack.c.l.b16 %v449
        %v741 = vunpack.c.l.b16 %v450
        %v742 = vunpack.c.l.b16 %v451
        %v743 = vunpack.c.l.b16 %v452
        %v744 = vunpack.c.l.b16 %v453
        %v745 = vunpack.c.l.b16 %v454
        %v746 = vunpack.c.l.b16 %v455
        %v747 = vunpack.c.l.b16 %v456
        %v748 = vunpack.c.l.b16 %v457
        %v749 = vunpack.c.l.b16 %v458
        %v750 = vunpack.c.l.b16 %v459
        %v751 = vunpack.c.l.b16 %v460
        %v752 = vunpack.c.l.b16 %v461
        %v753 = vunpack.c.l.b16 %v462
        %v754 = vunpack.c.l.b16 %v463
        %v755 = vunpack.c.l.b16 %v464
        %v756 = vunpack.c.l.b16 %v465
        %v757 = vunpack.c.l.b16 %v466
        %v758 = vunpack.c.l.b16 %v467
        %v759 = vunpack.c.l.b16 %v468
        %v760 = vunpack.c.l.b16 %v469
        %v761 = vunpack.c.l.b16 %v470
        %v762 = vunpack.c.l.b16 %v471
        %v763 = vunpack.c.l.b16 %v472
        %v764 = vunpack.c.l.b16 %v473
        %v765 = vunpack.c.l.b16 %v474
        %v766 = vunpack.c.l.b16 %v475
        %v767 = vunpack.c.l.b16 %v476
        %v768 = vunpack.c.l.b16 %v477
        %v769 = vunpack.c.l.b16 %v478
        %v770 = vunpack.c.l.b16 %v479
        %v771 = vunpack.c.l.b16 %v480
        %v772 = vunpack.c.l.b16 %v481
        %v773 = vunpack.c.l.b16 %v482
        %v774 = vunpack.c.l.b16 %v483
        %v775 = vunpack.c.l.b16 %v484
        %v776 = vunpack.c.l.b16 %v485
        %v777 = vunpack.c.l.b16 %v486
        %v778 = vunpack.c.l.b16 %v487
        %v779 = vunpack.c.l.b16 %v488
        %v780 = vunpack.c.l.b16 %v489
        %v781 = vunpack.c.l.b16 %v490
        %v782 = vpack.c.b16 %v655, %v654
        %v783 = vpack.c.b16 %v657, %v656
        %v784 = vpack.c.b16 %v659, %v658
        %v785 = vpack.c.b16 %v661, %v660
        %v786 = vpack.c.b16 %v663, %v662
        %v787 = vpack.c.b16 %v665, %v664
        %v788 = vpack.c.b16 %v667, %v666
        %v789 = vpack.c.b16 %v669, %v668
        %v790 = vpack.c.b16 %v671, %v670
        %v791 = vpack.c.b16 %v673, %v672
        %v792 = vpack.c.b16 %v675, %v674
        %v793 = vpack.c.b16 %v677, %v676
        %v794 = vpack.c.b16 %v679, %v678
        %v795 = vpack.c.b16 %v681, %v680
        %v796 = vpack.c.b16 %v683, %v682
        %v797 = vpack.c.b16 %v685, %v684
        %v798 = vpack.c.b16 %v687, %v686
        %v799 = vpack.c.b16 %v689, %v688
        %v800 = vpack.c.b16 %v691, %v690
        %v801 = vpack.c.b16 %v693, %v692
        %v802 = vpack.c.b16 %v695, %v694
        %v803 = vpack.c.b16 %v697, %v696
        %v804 = vpack.c.b16 %v699, %v698
        %v805 = vpack.c.b16 %v701, %v700
        %v806 = vpack.c.b16 %v703, %v702
        %v807 = vpack.c.b16 %v705, %v704
        %v808 = vpack.c.b16 %v707, %v706
        %v809 = vpack.c.b16 %v709, %v708
        %v810 = vpack.c.b16 %v711, %v710
        %v811 = vpack.c.b16 %v713, %v712
        %v812 = vpack.c.b16 %v715, %v714
        %v813 = vpack.c.b16 %v717, %v716
        %v814 = vpack.c.b16 %v719, %v718
        %v815 = vpack.c.b16 %v721, %v720
        %v816 = vpack.c.b16 %v723, %v722
        %v817 = vpack.c.b16 %v725, %v724
        %v818 = vpack.c.b16 %v727, %v726
        %v819 = vpack.c.b16 %v729, %v728
        %v820 = vpack.c.b16 %v731, %v730
        %v821 = vpack.c.b16 %v733, %v732
        %v822 = vpack.c.b16 %v735, %v734
        %v823 = vpack.c.b16 %v737, %v736
        %v824 = vpack.c.b16 %v739, %v738
        %v825 = vpack.c.b16 %v741, %v740
        %v826 = vpack.c.b16 %v743, %v742
        %v827 = vpack.c.b16 %v745, %v744
        %v828 = vpack.c.b16 %v747, %v746
        %v829 = vpack.c.b16 %v749, %v748
        %v830 = vpack.c.b16 %v751, %v750
        %v831 = vpack.c.b16 %v753, %v752
        %v832 = vpack.c.b16 %v755, %v754
        %v833 = vpack.c.b16 %v757, %v756
        %v834 = vpack.c.b16 %v759, %v758
        %v835 = vpack.c.b16 %v761, %v760
        %v836 = vpack.c.b16 %v763, %v762
        %v837 = vpack.c.b16 %v765, %v764
        %v838 = vpack.c.b16 %v767, %v766
        %v839 = vpack.c.b16 %v769, %v768
        %v840 = vpack.c.b16 %v771, %v770
        %v841 = vpack.c.b16 %v773, %v772
        %v842 = vpack.c.b16 %v775, %v774
        %v843 = vpack.c.b16 %v777, %v776
        %v844 = vpack.c.b16 %v779, %v778
        %v845 = vpack.c.b16 %v781, %v780
        %910 = vmatprep.subr.bf16.mxu0 0
        %911 = vmatpush1.bf16.msra.mxu0 %v782
        %912 = vmatprep.subr.bf16.mxu0 0
        %913 = vmatpush1.bf16.msra.mxu0 %v783
        %914 = vmatprep.subr.bf16.mxu0 0
        %915 = vmatpush1.bf16.msra.mxu0 %v784
        %916 = vmatprep.subr.bf16.mxu0 0
        %917 = vmatpush1.bf16.msra.mxu0 %v785
        %918 = vmatprep.subr.bf16.mxu0 0
        %919 = vmatpush1.bf16.msra.mxu0 %v786
        %920 = vmatprep.subr.bf16.mxu0 0
        %921 = vmatpush1.bf16.msra.mxu0 %v787
        %922 = vmatprep.subr.bf16.mxu0 0
        %923 = vmatpush1.bf16.msra.mxu0 %v788
        %924 = vmatprep.subr.bf16.mxu0 0
        %925 = vmatpush1.bf16.msra.mxu0 %v789
        %926 = vmatprep.subr.bf16.mxu0 0
        %927 = vmatpush1.bf16.msra.mxu0 %v790
        %928 = vmatprep.subr.bf16.mxu0 0
        %929 = vmatpush1.bf16.msra.mxu0 %v791
        %930 = vmatprep.subr.bf16.mxu0 0
        %931 = vmatpush1.bf16.msra.mxu0 %v792
        %932 = vmatprep.subr.bf16.mxu0 0
        %933 = vmatpush1.bf16.msra.mxu0 %v793
        %934 = vmatprep.subr.bf16.mxu0 0
        %935 = vmatpush1.bf16.msra.mxu0 %v794
        %936 = vmatprep.subr.bf16.mxu0 0
        %937 = vmatpush1.bf16.msra.mxu0 %v795
        %938 = vmatprep.subr.bf16.mxu0 0
        %939 = vmatpush1.bf16.msra.mxu0 %v796
        %940 = vmatprep.subr.bf16.mxu0 0
        %941 = vmatpush1.bf16.msra.mxu0 %v797
        %942 = vmatprep.mubr.bf16.mxu0 %v511
        %943 = vmatmul.mubr.bf16.gmra.mrb[0].mxu0 %v510
        %v944 = vpop.f32.mrb[0].mxu0
        %v945 = vadd.f32 %v496, %v944
        %v946 = vpop.f32.mrb[0].mxu0
        %v947 = vpop.f32.mrb[0].mxu0
        %v948 = vpop.f32.mrb[0].mxu0
        %949 = vdwg.mxu0
        %950 = vmatprep.subr.bf16.mxu0 0
        %951 = vmatpush1.bf16.msra.mxu0 %v798
        %952 = vmatprep.subr.bf16.mxu0 0
        %953 = vmatpush1.bf16.msra.mxu0 %v799
        %954 = vmatprep.subr.bf16.mxu0 0
        %955 = vmatpush1.bf16.msra.mxu0 %v800
        %956 = vmatprep.subr.bf16.mxu0 0
        %957 = vmatpush1.bf16.msra.mxu0 %v801
        %958 = vmatprep.subr.bf16.mxu0 0
        %959 = vmatpush1.bf16.msra.mxu0 %v802
        %960 = vmatprep.subr.bf16.mxu0 0
        %961 = vmatpush1.bf16.msra.mxu0 %v803
        %962 = vmatprep.subr.bf16.mxu0 0
        %963 = vmatpush1.bf16.msra.mxu0 %v804
        %964 = vmatprep.subr.bf16.mxu0 0
        %965 = vmatpush1.bf16.msra.mxu0 %v805
        %966 = vmatprep.subr.bf16.mxu0 0
        %967 = vmatpush1.bf16.msra.mxu0 %v806
        %968 = vmatprep.subr.bf16.mxu0 0
        %969 = vmatpush1.bf16.msra.mxu0 %v807
        %970 = vmatprep.subr.bf16.mxu0 0
        %971 = vmatpush1.bf16.msra.mxu0 %v808
        %972 = vmatprep.subr.bf16.mxu0 0
        %973 = vmatpush1.bf16.msra.mxu0 %v809
        %974 = vmatprep.subr.bf16.mxu0 0
        %975 = vmatpush1.bf16.msra.mxu0 %v810
        %976 = vmatprep.subr.bf16.mxu0 0
        %977 = vmatpush1.bf16.msra.mxu0 %v811
        %978 = vmatprep.subr.bf16.mxu0 0
        %979 = vmatpush1.bf16.msra.mxu0 %v812
        %980 = vmatprep.subr.bf16.mxu0 0
        %981 = vmatpush1.bf16.msra.mxu0 %v813
        %982 = vmatprep.mubr.bf16.mxu0 %v513
        %983 = vmatmul.mubr.bf16.gmra.mrb[0].mxu0 %v512
        %v984 = vpop.f32.mrb[0].mxu0
        %v985 = vadd.f32 %v945, %v984
        %v986 = vpop.f32.mrb[0].mxu0
        %v987 = vpop.f32.mrb[0].mxu0
        %v988 = vpop.f32.mrb[0].mxu0
        %989 = vdwg.mxu0
        %990 = vmatprep.subr.bf16.mxu0 0
        %991 = vmatpush1.bf16.msra.mxu0 %v814
        %992 = vmatprep.subr.bf16.mxu0 0
        %993 = vmatpush1.bf16.msra.mxu0 %v815
        %994 = vmatprep.subr.bf16.mxu0 0
        %995 = vmatpush1.bf16.msra.mxu0 %v816
        %996 = vmatprep.subr.bf16.mxu0 0
        %997 = vmatpush1.bf16.msra.mxu0 %v817
        %998 = vmatprep.subr.bf16.mxu0 0
        %999 = vmatpush1.bf16.msra.mxu0 %v818
        %1000 = vmatprep.subr.bf16.mxu0 0
        %1001 = vmatpush1.bf16.msra.mxu0 %v819
        %1002 = vmatprep.subr.bf16.mxu0 0
        %1003 = vmatpush1.bf16.msra.mxu0 %v820
        %1004 = vmatprep.subr.bf16.mxu0 0
        %1005 = vmatpush1.bf16.msra.mxu0 %v821
        %1006 = vmatprep.subr.bf16.mxu0 0
        %1007 = vmatpush1.bf16.msra.mxu0 %v822
        %1008 = vmatprep.subr.bf16.mxu0 0
        %1009 = vmatpush1.bf16.msra.mxu0 %v823
        %1010 = vmatprep.subr.bf16.mxu0 0
        %1011 = vmatpush1.bf16.msra.mxu0 %v824
        %1012 = vmatprep.subr.bf16.mxu0 0
        %1013 = vmatpush1.bf16.msra.mxu0 %v825
        %1014 = vmatprep.subr.bf16.mxu0 0
        %1015 = vmatpush1.bf16.msra.mxu0 %v826
        %1016 = vmatprep.subr.bf16.mxu0 0
        %1017 = vmatpush1.bf16.msra.mxu0 %v827
        %1018 = vmatprep.subr.bf16.mxu0 0
        %1019 = vmatpush1.bf16.msra.mxu0 %v828
        %1020 = vmatprep.subr.bf16.mxu0 0
        %1021 = vmatpush1.bf16.msra.mxu0 %v829
        %1022 = vmatprep.mubr.bf16.mxu0 %v515
        %1023 = vmatmul.mubr.bf16.gmra.mrb[0].mxu0 %v514
        %v1024 = vpop.f32.mrb[0].mxu0
        %v1025 = vadd.f32 %v985, %v1024
        %v1026 = vpop.f32.mrb[0].mxu0
        %v1027 = vpop.f32.mrb[0].mxu0
        %v1028 = vpop.f32.mrb[0].mxu0
        %1029 = vdwg.mxu0
        %1030 = vmatprep.subr.bf16.mxu0 0
        %1031 = vmatpush1.bf16.msra.mxu0 %v830
        %1032 = vmatprep.subr.bf16.mxu0 0
        %1033 = vmatpush1.bf16.msra.mxu0 %v831
        %1034 = vmatprep.subr.bf16.mxu0 0
        %1035 = vmatpush1.bf16.msra.mxu0 %v832
        %1036 = vmatprep.subr.bf16.mxu0 0
        %1037 = vmatpush1.bf16.msra.mxu0 %v833
        %1038 = vmatprep.subr.bf16.mxu0 0
        %1039 = vmatpush1.bf16.msra.mxu0 %v834
        %1040 = vmatprep.subr.bf16.mxu0 0
        %1041 = vmatpush1.bf16.msra.mxu0 %v835
        %1042 = vmatprep.subr.bf16.mxu0 0
        %1043 = vmatpush1.bf16.msra.mxu0 %v836
        %1044 = vmatprep.subr.bf16.mxu0 0
        %1045 = vmatpush1.bf16.msra.mxu0 %v837
        %1046 = vmatprep.subr.bf16.mxu0 0
        %1047 = vmatpush1.bf16.msra.mxu0 %v838
        %1048 = vmatprep.subr.bf16.mxu0 0
        %1049 = vmatpush1.bf16.msra.mxu0 %v839
        %1050 = vmatprep.subr.bf16.mxu0 0
        %1051 = vmatpush1.bf16.msra.mxu0 %v840
        %1052 = vmatprep.subr.bf16.mxu0 0
        %1053 = vmatpush1.bf16.msra.mxu0 %v841
        %1054 = vmatprep.subr.bf16.mxu0 0
        %1055 = vmatpush1.bf16.msra.mxu0 %v842
        %1056 = vmatprep.subr.bf16.mxu0 0
        %1057 = vmatpush1.bf16.msra.mxu0 %v843
        %1058 = vmatprep.subr.bf16.mxu0 0
        %1059 = vmatpush1.bf16.msra.mxu0 %v844
        %1060 = vmatprep.subr.bf16.mxu0 0
        %1061 = vmatpush1.bf16.msra.mxu0 %v845
        %1062 = vmatprep.mubr.bf16.mxu0 %v517
        %1063 = vmatmul.mubr.bf16.gmra.mrb[0].mxu0 %v516
        %v1064 = vpop.f32.mrb[0].mxu0
        %v1065 = vadd.f32 %v1025, %v1064
        %v1066 = vpop.f32.mrb[0].mxu0
        %v1067 = vpop.f32.mrb[0].mxu0
        %v1068 = vpop.f32.mrb[0].mxu0
        %1069 = vdwg.mxu0
        %v1070 = vtanh.pop %v1065
        %v1071 = vld [vmem:[#allocation8] sm:$0xff]
        %v1072 = vmul.f32 %v1070, %v1071
        %v1073 = vpack.c.bf16 %v1072, %v1072
        %v1074 = vld [vmem:[%s312] sm:$0xff]
        %v1075 = vld [vmem:[%s312 + $0x8] sm:$0xff]
        %v1076 = vld [vmem:[%s312 + $0x10] sm:$0xff]
        %v1077 = vld [vmem:[%s312 + $0x18] sm:$0xff]
        %v1078 = vld [vmem:[%s312 + $0x20] sm:$0xff]
        %v1079 = vld [vmem:[%s312 + $0x28] sm:$0xff]
        %v1080 = vld [vmem:[%s312 + $0x30] sm:$0xff]
        %v1081 = vld [vmem:[%s312 + $0x38] sm:$0xff]
        %v1082 = vld [vmem:[%s312 + $0x40] sm:$0xff]
        %v1083 = vld [vmem:[%s312 + $0x48] sm:$0xff]
        %v1084 = vld [vmem:[%s312 + $0x50] sm:$0xff]
        %v1085 = vld [vmem:[%s312 + $0x58] sm:$0xff]
        %v1086 = vld [vmem:[%s312 + $0x60] sm:$0xff]
        %v1087 = vld [vmem:[%s312 + $0x68] sm:$0xff]
        %v1088 = vld [vmem:[%s312 + $0x70] sm:$0xff]
        %v1089 = vld [vmem:[%s312 + $0x78] sm:$0xff]
        %v1090 = vld [vmem:[%s312 + $0x80] sm:$0xff]
        %v1091 = vld [vmem:[%s312 + $0x88] sm:$0xff]
        %v1092 = vld [vmem:[%s312 + $0x90] sm:$0xff]
        %v1093 = vld [vmem:[%s312 + $0x98] sm:$0xff]
        %v1094 = vld [vmem:[%s312 + $0xa0] sm:$0xff]
        %v1095 = vld [vmem:[%s312 + $0xa8] sm:$0xff]
        %v1096 = vld [vmem:[%s312 + $0xb0] sm:$0xff]
        %v1097 = vld [vmem:[%s312 + $0xb8] sm:$0xff]
        %v1098 = vld [vmem:[%s312 + $0xc0] sm:$0xff]
        %v1099 = vld [vmem:[%s312 + $0xc8] sm:$0xff]
        %v1100 = vld [vmem:[%s312 + $0xd0] sm:$0xff]
        %v1101 = vld [vmem:[%s312 + $0xd8] sm:$0xff]
        %v1102 = vld [vmem:[%s312 + $0xe0] sm:$0xff]
        %v1103 = vld [vmem:[%s312 + $0xe8] sm:$0xff]
        %v1104 = vld [vmem:[%s312 + $0xf0] sm:$0xff]
        %v1105 = vld [vmem:[%s312 + $0xf8] sm:$0xff]
        %v1106 = vld [vmem:[%s312 + $0x100] sm:$0xff]
        %v1107 = vld [vmem:[%s312 + $0x108] sm:$0xff]
        %v1108 = vld [vmem:[%s312 + $0x110] sm:$0xff]
        %v1109 = vld [vmem:[%s312 + $0x118] sm:$0xff]
        %v1110 = vld [vmem:[%s312 + $0x120] sm:$0xff]
        %v1111 = vld [vmem:[%s312 + $0x128] sm:$0xff]
        %v1112 = vld [vmem:[%s312 + $0x130] sm:$0xff]
        %v1113 = vld [vmem:[%s312 + $0x138] sm:$0xff]
        %v1114 = vld [vmem:[%s312 + $0x140] sm:$0xff]
        %v1115 = vld [vmem:[%s312 + $0x148] sm:$0xff]
        %v1116 = vld [vmem:[%s312 + $0x150] sm:$0xff]
        %v1117 = vld [vmem:[%s312 + $0x158] sm:$0xff]
        %v1118 = vld [vmem:[%s312 + $0x160] sm:$0xff]
        %v1119 = vld [vmem:[%s312 + $0x168] sm:$0xff]
        %v1120 = vld [vmem:[%s312 + $0x170] sm:$0xff]
        %v1121 = vld [vmem:[%s312 + $0x178] sm:$0xff]
        %v1122 = vld [vmem:[%s312 + $0x180] sm:$0xff]
        %v1123 = vld [vmem:[%s312 + $0x188] sm:$0xff]
        %v1124 = vld [vmem:[%s312 + $0x190] sm:$0xff]
        %v1125 = vld [vmem:[%s312 + $0x198] sm:$0xff]
        %v1126 = vld [vmem:[%s312 + $0x1a0] sm:$0xff]
        %v1127 = vld [vmem:[%s312 + $0x1a8] sm:$0xff]
        %v1128 = vld [vmem:[%s312 + $0x1b0] sm:$0xff]
        %v1129 = vld [vmem:[%s312 + $0x1b8] sm:$0xff]
        %v1130 = vld [vmem:[%s312 + $0x1c0] sm:$0xff]
        %v1131 = vld [vmem:[%s312 + $0x1c8] sm:$0xff]
        %v1132 = vld [vmem:[%s312 + $0x1d0] sm:$0xff]
        %v1133 = vld [vmem:[%s312 + $0x1d8] sm:$0xff]
        %v1134 = vld [vmem:[%s312 + $0x1e0] sm:$0xff]
        %v1135 = vld [vmem:[%s312 + $0x1e8] sm:$0xff]
        %v1136 = vld [vmem:[%s312 + $0x1f0] sm:$0xff]
        %v1137 = vld [vmem:[%s312 + $0x1f8] sm:$0xff]
        %v1138 = vld [vmem:[%s321] sm:$0xff]
        %v1140 = vlaneseq
        %v1141 = vshrl.u32 %v1140, 7
        %v1142 = vsub.s32 0, %v1141
        %v1143 = vrot.slane %v1138, %v1142
        %v1144 = vlaneseq
        %v1145 = vshrl.u32 %v1144, 7
        %v1146 = vsub.s32 1, %v1145
        %v1147 = vrot.slane %v1138, %v1146
        %v1148 = vlaneseq
        %v1149 = vshrl.u32 %v1148, 7
        %v1150 = vsub.s32 2, %v1149
        %v1151 = vrot.slane %v1138, %v1150
        %v1152 = vlaneseq
        %v1153 = vshrl.u32 %v1152, 7
        %v1154 = vsub.s32 3, %v1153
        %v1155 = vrot.slane %v1138, %v1154
        %v1156 = vlaneseq
        %v1157 = vshrl.u32 %v1156, 7
        %v1158 = vsub.s32 4, %v1157
        %v1159 = vrot.slane %v1138, %v1158
        %v1160 = vlaneseq
        %v1161 = vshrl.u32 %v1160, 7
        %v1162 = vsub.s32 5, %v1161
        %v1163 = vrot.slane %v1138, %v1162
        %v1164 = vlaneseq
        %v1165 = vshrl.u32 %v1164, 7
        %v1166 = vsub.s32 6, %v1165
        %v1167 = vrot.slane %v1138, %v1166
        %v1168 = vlaneseq
        %v1169 = vshrl.u32 %v1168, 7
        %v1170 = vsub.s32 7, %v1169
        %v1171 = vrot.slane %v1138, %v1170
        %v1244 = vunpack.c.l.b16 %v1074
        %v1245 = vunpack.c.h.b16 %v1074
        %v1246 = vunpack.c.l.b16 %v1075
        %v1247 = vunpack.c.h.b16 %v1075
        %v1248 = vunpack.c.l.b16 %v1076
        %v1249 = vunpack.c.h.b16 %v1076
        %v1250 = vunpack.c.l.b16 %v1077
        %v1251 = vunpack.c.h.b16 %v1077
        %v1252 = vunpack.c.l.b16 %v1078
        %v1253 = vunpack.c.h.b16 %v1078
        %v1254 = vunpack.c.l.b16 %v1079
        %v1255 = vunpack.c.h.b16 %v1079
        %v1256 = vunpack.c.l.b16 %v1080
        %v1257 = vunpack.c.h.b16 %v1080
        %v1258 = vunpack.c.l.b16 %v1081
        %v1259 = vunpack.c.h.b16 %v1081
        %v1260 = vunpack.c.l.b16 %v1082
        %v1261 = vunpack.c.h.b16 %v1082
        %v1262 = vunpack.c.l.b16 %v1083
        %v1263 = vunpack.c.h.b16 %v1083
        %v1264 = vunpack.c.l.b16 %v1084
        %v1265 = vunpack.c.h.b16 %v1084
        %v1266 = vunpack.c.l.b16 %v1085
        %v1267 = vunpack.c.h.b16 %v1085
        %v1268 = vunpack.c.l.b16 %v1086
        %v1269 = vunpack.c.h.b16 %v1086
        %v1270 = vunpack.c.l.b16 %v1087
        %v1271 = vunpack.c.h.b16 %v1087
        %v1272 = vunpack.c.l.b16 %v1088
        %v1273 = vunpack.c.h.b16 %v1088
        %v1274 = vunpack.c.l.b16 %v1089
        %v1275 = vunpack.c.h.b16 %v1089
        %v1276 = vunpack.c.l.b16 %v1090
        %v1277 = vunpack.c.h.b16 %v1090
        %v1278 = vunpack.c.l.b16 %v1091
        %v1279 = vunpack.c.h.b16 %v1091
        %v1280 = vunpack.c.l.b16 %v1092
        %v1281 = vunpack.c.h.b16 %v1092
        %v1282 = vunpack.c.l.b16 %v1093
        %v1283 = vunpack.c.h.b16 %v1093
        %v1284 = vunpack.c.l.b16 %v1094
        %v1285 = vunpack.c.h.b16 %v1094
        %v1286 = vunpack.c.l.b16 %v1095
        %v1287 = vunpack.c.h.b16 %v1095
        %v1288 = vunpack.c.l.b16 %v1096
        %v1289 = vunpack.c.h.b16 %v1096
        %v1290 = vunpack.c.l.b16 %v1097
        %v1291 = vunpack.c.h.b16 %v1097
        %v1292 = vunpack.c.l.b16 %v1098
        %v1293 = vunpack.c.h.b16 %v1098
        %v1294 = vunpack.c.l.b16 %v1099
        %v1295 = vunpack.c.h.b16 %v1099
        %v1296 = vunpack.c.l.b16 %v1100
        %v1297 = vunpack.c.h.b16 %v1100
        %v1298 = vunpack.c.l.b16 %v1101
        %v1299 = vunpack.c.h.b16 %v1101
        %v1300 = vunpack.c.l.b16 %v1102
        %v1301 = vunpack.c.h.b16 %v1102
        %v1302 = vunpack.c.l.b16 %v1103
        %v1303 = vunpack.c.h.b16 %v1103
        %v1304 = vunpack.c.l.b16 %v1104
        %v1305 = vunpack.c.h.b16 %v1104
        %v1306 = vunpack.c.l.b16 %v1105
        %v1307 = vunpack.c.h.b16 %v1105
        %v1308 = vunpack.c.l.b16 %v1106
        %v1309 = vunpack.c.h.b16 %v1106
        %v1310 = vunpack.c.l.b16 %v1107
        %v1311 = vunpack.c.h.b16 %v1107
        %v1312 = vunpack.c.l.b16 %v1108
        %v1313 = vunpack.c.h.b16 %v1108
        %v1314 = vunpack.c.l.b16 %v1109
        %v1315 = vunpack.c.h.b16 %v1109
        %v1316 = vunpack.c.l.b16 %v1110
        %v1317 = vunpack.c.h.b16 %v1110
        %v1318 = vunpack.c.l.b16 %v1111
        %v1319 = vunpack.c.h.b16 %v1111
        %v1320 = vunpack.c.l.b16 %v1112
        %v1321 = vunpack.c.h.b16 %v1112
        %v1322 = vunpack.c.l.b16 %v1113
        %v1323 = vunpack.c.h.b16 %v1113
        %v1324 = vunpack.c.l.b16 %v1114
        %v1325 = vunpack.c.h.b16 %v1114
        %v1326 = vunpack.c.l.b16 %v1115
        %v1327 = vunpack.c.h.b16 %v1115
        %v1328 = vunpack.c.l.b16 %v1116
        %v1329 = vunpack.c.h.b16 %v1116
        %v1330 = vunpack.c.l.b16 %v1117
        %v1331 = vunpack.c.h.b16 %v1117
        %v1332 = vunpack.c.l.b16 %v1118
        %v1333 = vunpack.c.h.b16 %v1118
        %v1334 = vunpack.c.l.b16 %v1119
        %v1335 = vunpack.c.h.b16 %v1119
        %v1336 = vunpack.c.l.b16 %v1120
        %v1337 = vunpack.c.h.b16 %v1120
        %v1338 = vunpack.c.l.b16 %v1121
        %v1339 = vunpack.c.h.b16 %v1121
        %v1340 = vunpack.c.l.b16 %v1122
        %v1341 = vunpack.c.h.b16 %v1122
        %v1342 = vunpack.c.l.b16 %v1123
        %v1343 = vunpack.c.h.b16 %v1123
        %v1344 = vunpack.c.l.b16 %v1124
        %v1345 = vunpack.c.h.b16 %v1124
        %v1346 = vunpack.c.l.b16 %v1125
        %v1347 = vunpack.c.h.b16 %v1125
        %v1348 = vunpack.c.l.b16 %v1126
        %v1349 = vunpack.c.h.b16 %v1126
        %v1350 = vunpack.c.l.b16 %v1127
        %v1351 = vunpack.c.h.b16 %v1127
        %v1352 = vunpack.c.l.b16 %v1128
        %v1353 = vunpack.c.h.b16 %v1128
        %v1354 = vunpack.c.l.b16 %v1129
        %v1355 = vunpack.c.h.b16 %v1129
        %v1356 = vunpack.c.l.b16 %v1130
        %v1357 = vunpack.c.h.b16 %v1130
        %v1358 = vunpack.c.l.b16 %v1131
        %v1359 = vunpack.c.h.b16 %v1131
        %v1360 = vunpack.c.l.b16 %v1132
        %v1361 = vunpack.c.h.b16 %v1132
        %v1362 = vunpack.c.l.b16 %v1133
        %v1363 = vunpack.c.h.b16 %v1133
        %v1364 = vunpack.c.l.b16 %v1134
        %v1365 = vunpack.c.h.b16 %v1134
        %v1366 = vunpack.c.l.b16 %v1135
        %v1367 = vunpack.c.h.b16 %v1135
        %v1368 = vunpack.c.l.b16 %v1136
        %v1369 = vunpack.c.h.b16 %v1136
        %v1370 = vunpack.c.l.b16 %v1137
        %v1371 = vunpack.c.h.b16 %v1137
        %v1372 = vpack.c.b16 %v1252, %v1244
        %v1373 = vpack.c.b16 %v1253, %v1245
        %v1374 = vpack.c.b16 %v1254, %v1246
        %v1375 = vpack.c.b16 %v1255, %v1247
        %v1376 = vpack.c.b16 %v1256, %v1248
        %v1377 = vpack.c.b16 %v1257, %v1249
        %v1378 = vpack.c.b16 %v1258, %v1250
        %v1379 = vpack.c.b16 %v1259, %v1251
        %v1380 = vpack.c.b16 %v1268, %v1260
        %v1381 = vpack.c.b16 %v1269, %v1261
        %v1382 = vpack.c.b16 %v1270, %v1262
        %v1383 = vpack.c.b16 %v1271, %v1263
        %v1384 = vpack.c.b16 %v1272, %v1264
        %v1385 = vpack.c.b16 %v1273, %v1265
        %v1386 = vpack.c.b16 %v1274, %v1266
        %v1387 = vpack.c.b16 %v1275, %v1267
        %v1388 = vpack.c.b16 %v1284, %v1276
        %v1389 = vpack.c.b16 %v1285, %v1277
        %v1390 = vpack.c.b16 %v1286, %v1278
        %v1391 = vpack.c.b16 %v1287, %v1279
        %v1392 = vpack.c.b16 %v1288, %v1280
        %v1393 = vpack.c.b16 %v1289, %v1281
        %v1394 = vpack.c.b16 %v1290, %v1282
        %v1395 = vpack.c.b16 %v1291, %v1283
        %v1396 = vpack.c.b16 %v1300, %v1292
        %v1397 = vpack.c.b16 %v1301, %v1293
        %v1398 = vpack.c.b16 %v1302, %v1294
        %v1399 = vpack.c.b16 %v1303, %v1295
        %v1400 = vpack.c.b16 %v1304, %v1296
        %v1401 = vpack.c.b16 %v1305, %v1297
        %v1402 = vpack.c.b16 %v1306, %v1298
        %v1403 = vpack.c.b16 %v1307, %v1299
        %v1404 = vpack.c.b16 %v1316, %v1308
        %v1405 = vpack.c.b16 %v1317, %v1309
        %v1406 = vpack.c.b16 %v1318, %v1310
        %v1407 = vpack.c.b16 %v1319, %v1311
        %v1408 = vpack.c.b16 %v1320, %v1312
        %v1409 = vpack.c.b16 %v1321, %v1313
        %v1410 = vpack.c.b16 %v1322, %v1314
        %v1411 = vpack.c.b16 %v1323, %v1315
        %v1412 = vpack.c.b16 %v1332, %v1324
        %v1413 = vpack.c.b16 %v1333, %v1325
        %v1414 = vpack.c.b16 %v1334, %v1326
        %v1415 = vpack.c.b16 %v1335, %v1327
        %v1416 = vpack.c.b16 %v1336, %v1328
        %v1417 = vpack.c.b16 %v1337, %v1329
        %v1418 = vpack.c.b16 %v1338, %v1330
        %v1419 = vpack.c.b16 %v1339, %v1331
        %v1420 = vpack.c.b16 %v1348, %v1340
        %v1421 = vpack.c.b16 %v1349, %v1341
        %v1422 = vpack.c.b16 %v1350, %v1342
        %v1423 = vpack.c.b16 %v1351, %v1343
        %v1424 = vpack.c.b16 %v1352, %v1344
        %v1425 = vpack.c.b16 %v1353, %v1345
        %v1426 = vpack.c.b16 %v1354, %v1346
        %v1427 = vpack.c.b16 %v1355, %v1347
        %v1428 = vpack.c.b16 %v1364, %v1356
        %v1429 = vpack.c.b16 %v1365, %v1357
        %v1430 = vpack.c.b16 %v1366, %v1358
        %v1431 = vpack.c.b16 %v1367, %v1359
        %v1432 = vpack.c.b16 %v1368, %v1360
        %v1433 = vpack.c.b16 %v1369, %v1361
        %v1434 = vpack.c.b16 %v1370, %v1362
        %v1435 = vpack.c.b16 %v1371, %v1363
        %1500 = vmatprep.subr.bf16.mxu0 %v1373
        %1501 = vmatpush1.bf16.msra.mxu0 %v1372
        %1502 = vmatprep.subr.bf16.mxu0 %v1381
        %1503 = vmatpush1.bf16.msra.mxu0 %v1380
        %1504 = vmatprep.subr.bf16.mxu0 %v1389
        %1505 = vmatpush1.bf16.msra.mxu0 %v1388
        %1506 = vmatprep.subr.bf16.mxu0 %v1397
        %1507 = vmatpush1.bf16.msra.mxu0 %v1396
        %1508 = vmatprep.subr.bf16.mxu0 %v1405
        %1509 = vmatpush1.bf16.msra.mxu0 %v1404
        %1510 = vmatprep.subr.bf16.mxu0 %v1413
        %1511 = vmatpush1.bf16.msra.mxu0 %v1412
        %1512 = vmatprep.subr.bf16.mxu0 %v1421
        %1513 = vmatpush1.bf16.msra.mxu0 %v1420
        %1514 = vmatprep.subr.bf16.mxu0 %v1429
        %1515 = vmatpush1.bf16.msra.mxu0 %v1428
        %1516 = vmatprep.subr.bf16.mxu0 0
        %1517 = vmatpush1.bf16.msra.mxu0 0
        %1518 = vmatprep.subr.bf16.mxu0 0
        %1519 = vmatpush1.bf16.msra.mxu0 0
        %1520 = vmatprep.subr.bf16.mxu0 0
        %1521 = vmatpush1.bf16.msra.mxu0 0
        %1522 = vmatprep.subr.bf16.mxu0 0
        %1523 = vmatpush1.bf16.msra.mxu0 0
        %1524 = vmatprep.subr.bf16.mxu0 0
        %1525 = vmatpush1.bf16.msra.mxu0 0
        %1526 = vmatprep.subr.bf16.mxu0 0
        %1527 = vmatpush1.bf16.msra.mxu0 0
        %1528 = vmatprep.subr.bf16.mxu0 0
        %1529 = vmatpush1.bf16.msra.mxu0 0
        %1530 = vmatprep.subr.bf16.mxu0 0
        %1531 = vmatpush1.bf16.msra.mxu0 0
        %1532 = vmatprep.mubr.bf16.mxu0 0
        %1533 = vmatmul.mubr.bf16.gmra.mrb[0].mxu0 %v1073
        %v1534 = vpop.f32.mrb[0].mxu0
        %v1535 = vadd.f32 %v1143, %v1534
        %v1536 = vpop.f32.mrb[0].mxu0
        %v1537 = vadd.f32 %v1147, %v1536
        %v1538 = vpop.f32.mrb[0].mxu0
        %v1539 = vpop.f32.mrb[0].mxu0
        %1540 = vdwg.mxu0
        %1541 = vmatprep.subr.bf16.mxu0 %v1375
        %1542 = vmatpush1.bf16.msra.mxu0 %v1374
        %1543 = vmatprep.subr.bf16.mxu0 %v1383
        %1544 = vmatpush1.bf16.msra.mxu0 %v1382
        %1545 = vmatprep.subr.bf16.mxu0 %v1391
        %1546 = vmatpush1.bf16.msra.mxu0 %v1390
        %1547 = vmatprep.subr.bf16.mxu0 %v1399
        %1548 = vmatpush1.bf16.msra.mxu0 %v1398
        %1549 = vmatprep.subr.bf16.mxu0 %v1407
        %1550 = vmatpush1.bf16.msra.mxu0 %v1406
        %1551 = vmatprep.subr.bf16.mxu0 %v1415
        %1552 = vmatpush1.bf16.msra.mxu0 %v1414
        %1553 = vmatprep.subr.bf16.mxu0 %v1423
        %1554 = vmatpush1.bf16.msra.mxu0 %v1422
        %1555 = vmatprep.subr.bf16.mxu0 %v1431
        %1556 = vmatpush1.bf16.msra.mxu0 %v1430
        %1557 = vmatprep.subr.bf16.mxu0 0
        %1558 = vmatpush1.bf16.msra.mxu0 0
        %1559 = vmatprep.subr.bf16.mxu0 0
        %1560 = vmatpush1.bf16.msra.mxu0 0
        %1561 = vmatprep.subr.bf16.mxu0 0
        %1562 = vmatpush1.bf16.msra.mxu0 0
        %1563 = vmatprep.subr.bf16.mxu0 0
        %1564 = vmatpush1.bf16.msra.mxu0 0
        %1565 = vmatprep.subr.bf16.mxu0 0
        %1566 = vmatpush1.bf16.msra.mxu0 0
        %1567 = vmatprep.subr.bf16.mxu0 0
        %1568 = vmatpush1.bf16.msra.mxu0 0
        %1569 = vmatprep.subr.bf16.mxu0 0
        %1570 = vmatpush1.bf16.msra.mxu0 0
        %1571 = vmatprep.subr.bf16.mxu0 0
        %1572 = vmatpush1.bf16.msra.mxu0 0
        %1573 = vmatprep.mubr.bf16.mxu0 0
        %1574 = vmatmul.mubr.bf16.gmra.mrb[0].mxu0 %v1073
        %v1575 = vpop.f32.mrb[0].mxu0
        %v1576 = vadd.f32 %v1151, %v1575
        %v1577 = vpop.f32.mrb[0].mxu0
        %v1578 = vadd.f32 %v1155, %v1577
        %v1579 = vpop.f32.mrb[0].mxu0
        %v1580 = vpop.f32.mrb[0].mxu0
        %1581 = vdwg.mxu0
        %1582 = vmatprep.subr.bf16.mxu0 %v1377
        %1583 = vmatpush1.bf16.msra.mxu0 %v1376
        %1584 = vmatprep.subr.bf16.mxu0 %v1385
        %1585 = vmatpush1.bf16.msra.mxu0 %v1384
        %1586 = vmatprep.subr.bf16.mxu0 %v1393
        %1587 = vmatpush1.bf16.msra.mxu0 %v1392
        %1588 = vmatprep.subr.bf16.mxu0 %v1401
        %1589 = vmatpush1.bf16.msra.mxu0 %v1400
        %1590 = vmatprep.subr.bf16.mxu0 %v1409
        %1591 = vmatpush1.bf16.msra.mxu0 %v1408
        %1592 = vmatprep.subr.bf16.mxu0 %v1417
        %1593 = vmatpush1.bf16.msra.mxu0 %v1416
        %1594 = vmatprep.subr.bf16.mxu0 %v1425
        %1595 = vmatpush1.bf16.msra.mxu0 %v1424
        %1596 = vmatprep.subr.bf16.mxu0 %v1433
        %1597 = vmatpush1.bf16.msra.mxu0 %v1432
        %1598 = vmatprep.subr.bf16.mxu0 0
        %1599 = vmatpush1.bf16.msra.mxu0 0
        %1600 = vmatprep.subr.bf16.mxu0 0
        %1601 = vmatpush1.bf16.msra.mxu0 0
        %1602 = vmatprep.subr.bf16.mxu0 0
        %1603 = vmatpush1.bf16.msra.mxu0 0
        %1604 = vmatprep.subr.bf16.mxu0 0
        %1605 = vmatpush1.bf16.msra.mxu0 0
        %1606 = vmatprep.subr.bf16.mxu0 0
        %1607 = vmatpush1.bf16.msra.mxu0 0
        %1608 = vmatprep.subr.bf16.mxu0 0
        %1609 = vmatpush1.bf16.msra.mxu0 0
        %1610 = vmatprep.subr.bf16.mxu0 0
        %1611 = vmatpush1.bf16.msra.mxu0 0
        %1612 = vmatprep.subr.bf16.mxu0 0
        %1613 = vmatpush1.bf16.msra.mxu0 0
        %1614 = vmatprep.mubr.bf16.mxu0 0
        %1615 = vmatmul.mubr.bf16.gmra.mrb[0].mxu0 %v1073
        %v1616 = vpop.f32.mrb[0].mxu0
        %v1617 = vadd.f32 %v1159, %v1616
        %v1618 = vpop.f32.mrb[0].mxu0
        %v1619 = vadd.f32 %v1163, %v1618
        %v1620 = vpop.f32.mrb[0].mxu0
        %v1621 = vpop.f32.mrb[0].mxu0
        %1622 = vdwg.mxu0
        %1623 = vmatprep.subr.bf16.mxu0 %v1379
        %1624 = vmatpush1.bf16.msra.mxu0 %v1378
        %1625 = vmatprep.subr.bf16.mxu0 %v1387
        %1626 = vmatpush1.bf16.msra.mxu0 %v1386
        %1627 = vmatprep.subr.bf16.mxu0 %v1395
        %1628 = vmatpush1.bf16.msra.mxu0 %v1394
        %1629 = vmatprep.subr.bf16.mxu0 %v1403
        %1630 = vmatpush1.bf16.msra.mxu0 %v1402
        %1631 = vmatprep.subr.bf16.mxu0 %v1411
        %1632 = vmatpush1.bf16.msra.mxu0 %v1410
        %1633 = vmatprep.subr.bf16.mxu0 %v1419
        %1634 = vmatpush1.bf16.msra.mxu0 %v1418
        %1635 = vmatprep.subr.bf16.mxu0 %v1427
        %1636 = vmatpush1.bf16.msra.mxu0 %v1426
        %1637 = vmatprep.subr.bf16.mxu0 %v1435
        %1638 = vmatpush1.bf16.msra.mxu0 %v1434
        %1639 = vmatprep.subr.bf16.mxu0 0
        %1640 = vmatpush1.bf16.msra.mxu0 0
        %1641 = vmatprep.subr.bf16.mxu0 0
        %1642 = vmatpush1.bf16.msra.mxu0 0
        %1643 = vmatprep.subr.bf16.mxu0 0
        %1644 = vmatpush1.bf16.msra.mxu0 0
        %1645 = vmatprep.subr.bf16.mxu0 0
        %1646 = vmatpush1.bf16.msra.mxu0 0
        %1647 = vmatprep.subr.bf16.mxu0 0
        %1648 = vmatpush1.bf16.msra.mxu0 0
        %1649 = vmatprep.subr.bf16.mxu0 0
        %1650 = vmatpush1.bf16.msra.mxu0 0
        %1651 = vmatprep.subr.bf16.mxu0 0
        %1652 = vmatpush1.bf16.msra.mxu0 0
        %1653 = vmatprep.subr.bf16.mxu0 0
        %1654 = vmatpush1.bf16.msra.mxu0 0
        %1655 = vmatprep.mubr.bf16.mxu0 0
        %1656 = vmatmul.mubr.bf16.gmra.mrb[0].mxu0 %v1073
        %v1657 = vpop.f32.mrb[0].mxu0
        %v1658 = vadd.f32 %v1167, %v1657
        %v1659 = vpop.f32.mrb[0].mxu0
        %v1660 = vadd.f32 %v1171, %v1659
        %v1661 = vpop.f32.mrb[0].mxu0
        %v1662 = vpop.f32.mrb[0].mxu0
        %1663 = vdwg.mxu0
        %1664 = vst [vmem:[%s354] sm:$0xff] %v1535
        %1665 = vst [vmem:[%s354 + $0x8] sm:$0xff] %v1537
        %1666 = vst [vmem:[%s354 + $0x10] sm:$0xff] %v1576
        %1667 = vst [vmem:[%s354 + $0x18] sm:$0xff] %v1578
        %1668 = vst [vmem:[%s354 + $0x20] sm:$0xff] %v1617
        %1669 = vst [vmem:[%s354 + $0x28] sm:$0xff] %v1619
        %1670 = vst [vmem:[%s354 + $0x30] sm:$0xff] %v1658
        %1671 = vst [vmem:[%s354 + $0x38] sm:$0xff] %v1660
        %s1672 = sand.u32 %s167, 1
        %s1673 = scalar_lea.sflag [#allocation4], %s1672
        %s1674 = sand.u32 %s167, 1
        %s1675 = smul.addr %s1674, 64
        %s1676 = scalar_lea.vmem [#allocation12], %s1675
        // Predicated region
        $region69: #{tpu_custom_call.1} parent=43 // pred_check
          %p1677 = pneg %p177
        $region70: #{tpu_custom_call.1} parent=43 // pred_check_branch
          %1679 = sbr.rel (%p1677) target = $region72
        $region71: #{tpu_custom_call.1} parent=43 // pred_region
          %s1680 = smul.u32 8, %s23
          %s1682 = ssub.s32 1024, 1024
          %1683 = vsyncadd %s1673, %s1682
          %s1684 = smul.addr %s1680, 128
          %s1685 = scalar_lea.hbm %s6, %s1684
          %s1687 = sshll.u32 %s1676, 4
          %s1688 = int_to_ptr.vmem [resolvable:$true] %s1687
          %1690 = dma.vmem_to_hbm [thread:$0]  %s1688, 1024, %s1685, %s1673
        $region72: #{tpu_custom_call.1} parent=43 // pred_fallthru
          _
      $region44: #{tpu_custom_call.1} parent=5 // pred_fallthru
        _
      %p1691 = scmp.le.s32.totalorder 2, %s18
      // Predicated region
      $region73: #{tpu_custom_call.1} parent=5 // pred_check
        %p1692 = pneg %p1691
      $region74: #{tpu_custom_call.1} parent=5 // pred_check_branch
        %1694 = sbr.rel (%p1692) target = $region76
      $region75: #{tpu_custom_call.1} parent=5 // pred_region
        %s1695 = ssub.s32 %s18, 2
        // Predicated region
        $region77: #{tpu_custom_call.1} parent=75 // pred_check
          %p1696 = pneg %p183
        $region78: #{tpu_custom_call.1} parent=75 // pred_check_branch
          %1698 = sbr.rel (%p1696) target = $region80
        $region79: #{tpu_custom_call.1} parent=75 // pred_region
          %s1699 = sand.u32 %s168, 1
          %s1700 = scalar_lea.sflag [#allocation4], %s1699
          %s1701 = sand.u32 %s168, 1
          %s1702 = smul.addr %s1701, 64
          %s1703 = scalar_lea.vmem [#allocation12], %s1702
          %1704 = dma.done %s1700, 1024
        $region80: #{tpu_custom_call.1} parent=75 // pred_fallthru
          _
      $region76: #{tpu_custom_call.1} parent=5 // pred_fallthru
        _
    $region6: #{tpu_custom_call.1} parent=1 // loop_footer
      %s22 = sadd.s32 1, %s18
    $region7: #{tpu_custom_call.1} parent=1 // loop_footer_branch
      %17 = sbr.rel target = $region3
    $region8: #{tpu_custom_call.1} parent=1 // loop_exit
      _
    %1705 = vsyncpa [#allocation3], 1
    %s1706 = scalar_lea.sflag [#allocation3], 1
    %1707 = vsyncpa %s1706, 1
    %1708 = vsyncpa [#allocation6], 1
    %1709 = vsyncpa [#allocation9], 1
    %1710 = vsyncpa [#allocation4], 1
    %s1711 = scalar_lea.sflag [#allocation4], 1
    %1712 = vsyncpa %s1711, 1

</llo_original>
